<compile_context>
chip_gen: v7x
topology: tpu7x:2x2x1
jax: 0.10.0
libtpu: 0.0.40
codegen_flags: <defaults>
</compile_context>

<pallas_src>
import functools

import jax
import jax.numpy as jnp
from jax.experimental import pallas as pl
from jax.experimental.pallas import tpu as pltpu

LEAKY_SLOPE = 0.01   # nn.LeakyReLU default
BN_EPS = 1e-5        # nn.BatchNorm2d default
_APRON = 128         # lane-aligned zero apron for in-kernel conv shifts


def _basic_block_kernel(x_ref, w1_ref, w2_ref, g1_ref, b1_ref, g2_ref, b2_ref,
                        o_ref, *, N, C, H, W):
    """Fused conv3x3->BN->LReLU->conv3x3->BN->(+res)->LReLU on (N*C, H*W)."""
    NC = N * C
    HW = H * W
    inv_cnt = 1.0 / float(N * HW)

    x_block = x_ref[...]                            # (NC, HW), row = n*C + c

    # Halo masks: only the column (w) wrap needs masking -- the zero apron
    # already zeroes row over/under-flow -- and kx == 1 taps need no mask.
    # Pre-broadcast once to the packed block shape (no per-use broadcast).
    pos = jax.lax.broadcasted_iota(jnp.int32, (1, HW), 1)
    col = pos % W
    left_ok = jnp.broadcast_to((col >= 1).astype(jnp.float32), (NC, HW))
    right_ok = jnp.broadcast_to((col <= W - 2).astype(jnp.float32), (NC, HW))

    zpad = jnp.zeros((NC, _APRON), jnp.float32)

    def conv3x3(in_block, w_cols):
        """3x3 'same' conv on the packed block (VPU broadcast-FMA).

        w_cols: (NC, 9*C) with w_cols[n*C+ci, t*C+co] = hwio[t//3, t%3, ci, co].
        partial[co] accumulates with INPUT channels on the sublane axis; the
        epilogue reduces over ci per batch group and interleaves co back into
        packed row order.
        """
        partial = [jnp.zeros((NC, HW), jnp.float32) for _ in range(C)]
        padded = jnp.concatenate([zpad, in_block, zpad], axis=-1)  # aligned
        for t in range(9):
            ky, kx = divmod(t, 3)
            shift = (ky - 1) * W + (kx - 1)
            tap = padded[:, _APRON + shift:_APRON + shift + HW]    # static slice
            if kx == 0:
                tap = tap * left_ok
            elif kx == 2:
                tap = tap * right_ok
            for co in range(C):
                wcol = w_cols[:, t * C + co:t * C + co + 1]        # (NC, 1)
                partial[co] = partial[co] + wcol * tap             # full vregs
        # Sublane group-reduce over ci within each batch group, then interleave
        # output channels into (NC, HW) packed row order (row = n*C + co).
        rows = []
        for n in range(N):
            lo = n * C
            for co in range(C):
                grp = partial[co][lo:lo + C, :]                    # (C, HW)
                rows.append(jnp.sum(grp, axis=0, keepdims=True))   # (1, HW)
        return jnp.concatenate(rows, axis=0)                       # (NC, HW)

    def batchnorm(v, g_col, b_col):
        """Training-mode BN per channel over (N, H, W); two-pass variance."""
        row_sum = jnp.sum(v, axis=1, keepdims=True)                # (NC, 1)
        ch_sum = row_sum[0:C, :]
        for n in range(1, N):
            ch_sum = ch_sum + row_sum[n * C:(n + 1) * C, :]
        mean_col = jnp.concatenate([ch_sum] * N, axis=0) * inv_cnt  # (NC, 1)
        centered = v - mean_col
        sq_sum = jnp.sum(centered * centered, axis=1, keepdims=True)
        ch_sq = sq_sum[0:C, :]
        for n in range(1, N):
            ch_sq = ch_sq + sq_sum[n * C:(n + 1) * C, :]
        var_col = jnp.concatenate([ch_sq] * N, axis=0) * inv_cnt
        inv_std = jax.lax.rsqrt(var_col + BN_EPS)                  # EUP slot
        return centered * (inv_std * g_col) + b_col

    def leaky(v):
        return jnp.where(v >= 0, v, LEAKY_SLOPE * v)

    # Stage 1: conv1 -> bn1 -> leaky_relu   (all in VMEM / vregs)
    y = leaky(batchnorm(conv3x3(x_block, w1_ref[...]), g1_ref[...], b1_ref[...]))
    # Stage 2: conv2 -> bn2 -> +residual -> leaky_relu, one full-block store.
    y = batchnorm(conv3x3(y, w2_ref[...]), g2_ref[...], b2_ref[...]) + x_block
    o_ref[...] = leaky(y)


def basic_block_forward(x_nchw, w1_hwio, w2_hwio, gamma1, beta1, gamma2, beta2):
    """JAX wrapper reproducing BasicBlock.forward (stride=1, no downsample).

    x_nchw : (N, C, H, W) float32
    w1, w2 : (3, 3, Cin, Cout) float32  (HWIO; torch OIHW -> transpose(2,3,1,0))
    gamma*, beta* : (Cout,) float32
    Returns (N, C, H, W) float32.
    """
    N, C, H, W = x_nchw.shape
    Cout = w1_hwio.shape[-1]
    assert Cout == C, "residual add requires in_channels == out_channels"
    NC, HW = N * C, H * W
    assert HW % 128 == 0 and NC % 8 == 0, "packed layout wants full (8,128) tiles"

    # Only free reshapes / tiny param prep in the wrapper: no pad, no transpose
    # of the activation, no extra HBM pass.
    x_flat = x_nchw.reshape(NC, HW).astype(jnp.float32)

    def weight_cols(w_hwio):
        w9 = w_hwio.astype(jnp.float32).reshape(9, C, C)        # (t, ci, co)
        cols = jnp.transpose(w9, (1, 0, 2)).reshape(C, 9 * C)   # (ci, t*C+co)
        return jnp.tile(cols, (N, 1))                           # (NC, 9*C)

    def affine_col(p):
        return jnp.tile(p.astype(jnp.float32).reshape(C, 1), (N, 1))  # (NC, 1)

    w1c, w2c = weight_cols(w1_hwio), weight_cols(w2_hwio)
    g1c, b1c = affine_col(gamma1), affine_col(beta1)
    g2c, b2c = affine_col(gamma2), affine_col(beta2)

    vmem = pl.BlockSpec(memory_space=pltpu.MemorySpace.VMEM)
    flops = 2 * (2 * 9 * N * HW * C * C)                 # both convs (MAC = 2)
    bytes_accessed = (2 * NC * HW + 2 * NC * 9 * C + 4 * NC) * 4

    kernel = functools.partial(_basic_block_kernel, N=N, C=C, H=H, W=W)
    out = pl.pallas_call(
        kernel,
        out_shape=jax.ShapeDtypeStruct((NC, HW), jnp.float32),
        in_specs=[vmem] * 7,
        out_specs=vmem,
        cost_estimate=pl.CostEstimate(flops=flops, transcendentals=2 * NC,
                                      bytes_accessed=bytes_accessed),
    )(x_flat, w1c, w2c, g1c, b1c, g2c, b2c)

    return out.reshape(N, C, H, W)                        # free reshape


def _reference_forward(x, w1, w2, g1, b1, g2, b2):
    """Pure-JAX (XLA) reference of BasicBlock.forward for a numerics check."""
    def conv(v, w):
        return jax.lax.conv_general_dilated(
            v, w, window_strides=(1, 1), padding=((1, 1), (1, 1)),
            dimension_numbers=("NCHW", "HWIO", "NCHW"),
            precision=jax.lax.Precision.HIGHEST)

    def bn(v, g, b):
        m = jnp.mean(v, axis=(0, 2, 3), keepdims=True)
        var = jnp.mean((v - m) ** 2, axis=(0, 2, 3), keepdims=True)
        vhat = (v - m) * jax.lax.rsqrt(var + BN_EPS)
        return vhat * g.reshape(1, -1, 1, 1) + b.reshape(1, -1, 1, 1)

    def lrelu(v):
        return jnp.where(v >= 0, v, LEAKY_SLOPE * v)

    y = lrelu(bn(conv(x, w1), g1, b1))
    y = bn(conv(y, w2), g2, b2) + x
    return lrelu(y)


if __name__ == "__main__":
    # Small shapes consistent with the module: batch=2, channels=4, spatial=16.
    N, C, H, W = 2, 4, 16, 16

    key = jax.random.PRNGKey(0)
    kx, kw1, kw2 = jax.random.split(key, 3)

    x = jax.random.normal(kx, (N, C, H, W), dtype=jnp.float32)
    # Deterministic conv weights (HWIO layout), bias-free as in conv3x3().
    w1 = 0.1 * jax.random.normal(kw1, (3, 3, C, C), dtype=jnp.float32)
    w2 = 0.1 * jax.random.normal(kw2, (3, 3, C, C), dtype=jnp.float32)
    # BatchNorm affine params at their PyTorch defaults: gamma=1, beta=0.
    gamma1 = jnp.ones((C,), jnp.float32)
    beta1 = jnp.zeros((C,), jnp.float32)
    gamma2 = jnp.ones((C,), jnp.float32)
    beta2 = jnp.zeros((C,), jnp.float32)

    out = basic_block_forward(x, w1, w2, gamma1, beta1, gamma2, beta2)
    jax.block_until_ready(out)
    assert out.shape == (N, C, H, W)

    ref = _reference_forward(x, w1, w2, gamma1, beta1, gamma2, beta2)
    err = float(jnp.max(jnp.abs(out - ref)))
    assert err < 1e-3, f"kernel/reference mismatch: max abs err = {err}"

    print("KERNEL_OK")
</pallas_src>

<mosaic_0001>
module attributes {stable_mosaic.version = 11 : i64} {
  func.func @_basic_block_kernel(%arg0: memref<8x256xf32, #tpu.memory_space<vmem>>, %arg1: memref<8x36xf32, #tpu.memory_space<vmem>>, %arg2: memref<8x36xf32, #tpu.memory_space<vmem>>, %arg3: memref<8x1xf32, #tpu.memory_space<vmem>>, %arg4: memref<8x1xf32, #tpu.memory_space<vmem>>, %arg5: memref<8x1xf32, #tpu.memory_space<vmem>>, %arg6: memref<8x1xf32, #tpu.memory_space<vmem>>, %arg7: memref<8x256xf32, #tpu.memory_space<vmem>>) attributes {dimension_semantics = [], scalar_prefetch = 0 : i64, scratch_operands = 0 : i64, tpu.core_type = #tpu.core_type<tc>} {
    %c0 = arith.constant 0 : index
    %c0_0 = arith.constant 0 : index
    %0 = vector.load %arg0[%c0, %c0_0] : memref<8x256xf32, #tpu.memory_space<vmem>>, vector<8x256xf32>
    %1 = tpu.iota {dimensions = array<i32: 1>} : vector<1x256xi32>
    %c16_i32 = arith.constant 16 : i32
    %c0_i32 = arith.constant 0 : i32
    %2 = arith.cmpi eq, %c16_i32, %c0_i32 : i32
    %c1_i32 = arith.constant 1 : i32
    %3 = arith.select %2, %c1_i32, %c16_i32 : i32
    %4 = vector.broadcast %3 : i32 to vector<1x256xi32>
    %5 = arith.remsi %1, %4 : vector<1x256xi32>
    %c0_i32_1 = arith.constant 0 : i32
    %6 = vector.broadcast %c0_i32_1 : i32 to vector<1x256xi32>
    %7 = arith.cmpi ne, %5, %6 : vector<1x256xi32>
    %c0_i32_2 = arith.constant 0 : i32
    %8 = vector.broadcast %c0_i32_2 : i32 to vector<1x256xi32>
    %9 = arith.cmpi slt, %5, %8 : vector<1x256xi32>
    %c0_i32_3 = arith.constant 0 : i32
    %10 = arith.cmpi slt, %3, %c0_i32_3 : i32
    %11 = vector.broadcast %10 : i1 to vector<1x256xi1>
    %12 = vector.broadcast %11 : vector<1x256xi1> to vector<1x256xi1>
    %13 = arith.xori %9, %12 : vector<1x256xi1>
    %14 = arith.andi %13, %7 : vector<1x256xi1>
    %15 = vector.broadcast %3 : i32 to vector<1x256xi32>
    %16 = arith.addi %5, %15 : vector<1x256xi32>
    %17 = arith.select %14, %16, %5 : vector<1x256xi1>, vector<1x256xi32>
    %c1_i32_4 = arith.constant 1 : i32
    %18 = vector.broadcast %c1_i32_4 : i32 to vector<1x256xi32>
    %19 = arith.cmpi sge, %17, %18 : vector<1x256xi32>
    %20 = arith.extui %19 : vector<1x256xi1> to vector<1x256xi32>
    %21 = arith.sitofp %20 : vector<1x256xi32> to vector<1x256xf32>
    %22 = vector.shape_cast %21 : vector<1x256xf32> to vector<1x256xf32>
    %23 = vector.broadcast %22 : vector<1x256xf32> to vector<8x256xf32>
    %c14_i32 = arith.constant 14 : i32
    %24 = vector.broadcast %c14_i32 : i32 to vector<1x256xi32>
    %25 = arith.cmpi sle, %17, %24 : vector<1x256xi32>
    %26 = arith.extui %25 : vector<1x256xi1> to vector<1x256xi32>
    %27 = arith.sitofp %26 : vector<1x256xi32> to vector<1x256xf32>
    %28 = vector.shape_cast %27 : vector<1x256xf32> to vector<1x256xf32>
    %29 = vector.broadcast %28 : vector<1x256xf32> to vector<8x256xf32>
    %cst = arith.constant 0.000000e+00 : f32
    %30 = vector.broadcast %cst : f32 to vector<8x128xf32>
    %c0_5 = arith.constant 0 : index
    %c0_6 = arith.constant 0 : index
    %31 = vector.load %arg1[%c0_5, %c0_6] : memref<8x36xf32, #tpu.memory_space<vmem>>, vector<8x36xf32>
    %cst_7 = arith.constant 0.000000e+00 : f32
    %32 = vector.broadcast %cst_7 : f32 to vector<8x256xf32>
    %cst_8 = arith.constant 0.000000e+00 : f32
    %33 = vector.broadcast %cst_8 : f32 to vector<8x256xf32>
    %cst_9 = arith.constant 0.000000e+00 : f32
    %34 = vector.broadcast %cst_9 : f32 to vector<8x256xf32>
    %cst_10 = arith.constant 0.000000e+00 : f32
    %35 = vector.broadcast %cst_10 : f32 to vector<8x256xf32>
    %36 = tpu.concatenate %30, %0, %30 in 1 : vector<8x128xf32>, vector<8x256xf32>, vector<8x128xf32> -> vector<8x512xf32>
    %37 = vector.extract_strided_slice %36 {offsets = [0, 111], sizes = [8, 256], strides = [1, 1]} : vector<8x512xf32> to vector<8x256xf32>
    %38 = arith.mulf %37, %23 : vector<8x256xf32>
    %39 = vector.extract_strided_slice %31 {offsets = [0, 0], sizes = [8, 1], strides = [1, 1]} : vector<8x36xf32> to vector<8x1xf32>
    %40 = vector.broadcast %39 : vector<8x1xf32> to vector<8x256xf32>
    %41 = arith.mulf %40, %38 : vector<8x256xf32>
    %42 = arith.addf %32, %41 : vector<8x256xf32>
    %43 = vector.extract_strided_slice %31 {offsets = [0, 1], sizes = [8, 1], strides = [1, 1]} : vector<8x36xf32> to vector<8x1xf32>
    %44 = vector.broadcast %43 : vector<8x1xf32> to vector<8x256xf32>
    %45 = arith.mulf %44, %38 : vector<8x256xf32>
    %46 = arith.addf %33, %45 : vector<8x256xf32>
    %47 = vector.extract_strided_slice %31 {offsets = [0, 2], sizes = [8, 1], strides = [1, 1]} : vector<8x36xf32> to vector<8x1xf32>
    %48 = vector.broadcast %47 : vector<8x1xf32> to vector<8x256xf32>
    %49 = arith.mulf %48, %38 : vector<8x256xf32>
    %50 = arith.addf %34, %49 : vector<8x256xf32>
    %51 = vector.extract_strided_slice %31 {offsets = [0, 3], sizes = [8, 1], strides = [1, 1]} : vector<8x36xf32> to vector<8x1xf32>
    %52 = vector.broadcast %51 : vector<8x1xf32> to vector<8x256xf32>
    %53 = arith.mulf %52, %38 : vector<8x256xf32>
    %54 = arith.addf %35, %53 : vector<8x256xf32>
    %55 = vector.extract_strided_slice %36 {offsets = [0, 112], sizes = [8, 256], strides = [1, 1]} : vector<8x512xf32> to vector<8x256xf32>
    %56 = vector.extract_strided_slice %31 {offsets = [0, 4], sizes = [8, 1], strides = [1, 1]} : vector<8x36xf32> to vector<8x1xf32>
    %57 = vector.broadcast %56 : vector<8x1xf32> to vector<8x256xf32>
    %58 = arith.mulf %57, %55 : vector<8x256xf32>
    %59 = arith.addf %42, %58 : vector<8x256xf32>
    %60 = vector.extract_strided_slice %31 {offsets = [0, 5], sizes = [8, 1], strides = [1, 1]} : vector<8x36xf32> to vector<8x1xf32>
    %61 = vector.broadcast %60 : vector<8x1xf32> to vector<8x256xf32>
    %62 = arith.mulf %61, %55 : vector<8x256xf32>
    %63 = arith.addf %46, %62 : vector<8x256xf32>
    %64 = vector.extract_strided_slice %31 {offsets = [0, 6], sizes = [8, 1], strides = [1, 1]} : vector<8x36xf32> to vector<8x1xf32>
    %65 = vector.broadcast %64 : vector<8x1xf32> to vector<8x256xf32>
    %66 = arith.mulf %65, %55 : vector<8x256xf32>
    %67 = arith.addf %50, %66 : vector<8x256xf32>
    %68 = vector.extract_strided_slice %31 {offsets = [0, 7], sizes = [8, 1], strides = [1, 1]} : vector<8x36xf32> to vector<8x1xf32>
    %69 = vector.broadcast %68 : vector<8x1xf32> to vector<8x256xf32>
    %70 = arith.mulf %69, %55 : vector<8x256xf32>
    %71 = arith.addf %54, %70 : vector<8x256xf32>
    %72 = vector.extract_strided_slice %36 {offsets = [0, 113], sizes = [8, 256], strides = [1, 1]} : vector<8x512xf32> to vector<8x256xf32>
    %73 = arith.mulf %72, %29 : vector<8x256xf32>
    %74 = vector.extract_strided_slice %31 {offsets = [0, 8], sizes = [8, 1], strides = [1, 1]} : vector<8x36xf32> to vector<8x1xf32>
    %75 = vector.broadcast %74 : vector<8x1xf32> to vector<8x256xf32>
    %76 = arith.mulf %75, %73 : vector<8x256xf32>
    %77 = arith.addf %59, %76 : vector<8x256xf32>
    %78 = vector.extract_strided_slice %31 {offsets = [0, 9], sizes = [8, 1], strides = [1, 1]} : vector<8x36xf32> to vector<8x1xf32>
    %79 = vector.broadcast %78 : vector<8x1xf32> to vector<8x256xf32>
    %80 = arith.mulf %79, %73 : vector<8x256xf32>
    %81 = arith.addf %63, %80 : vector<8x256xf32>
    %82 = vector.extract_strided_slice %31 {offsets = [0, 10], sizes = [8, 1], strides = [1, 1]} : vector<8x36xf32> to vector<8x1xf32>
    %83 = vector.broadcast %82 : vector<8x1xf32> to vector<8x256xf32>
    %84 = arith.mulf %83, %73 : vector<8x256xf32>
    %85 = arith.addf %67, %84 : vector<8x256xf32>
    %86 = vector.extract_strided_slice %31 {offsets = [0, 11], sizes = [8, 1], strides = [1, 1]} : vector<8x36xf32> to vector<8x1xf32>
    %87 = vector.broadcast %86 : vector<8x1xf32> to vector<8x256xf32>
    %88 = arith.mulf %87, %73 : vector<8x256xf32>
    %89 = arith.addf %71, %88 : vector<8x256xf32>
    %90 = vector.extract_strided_slice %36 {offsets = [0, 127], sizes = [8, 256], strides = [1, 1]} : vector<8x512xf32> to vector<8x256xf32>
    %91 = arith.mulf %90, %23 : vector<8x256xf32>
    %92 = vector.extract_strided_slice %31 {offsets = [0, 12], sizes = [8, 1], strides = [1, 1]} : vector<8x36xf32> to vector<8x1xf32>
    %93 = vector.broadcast %92 : vector<8x1xf32> to vector<8x256xf32>
    %94 = arith.mulf %93, %91 : vector<8x256xf32>
    %95 = arith.addf %77, %94 : vector<8x256xf32>
    %96 = vector.extract_strided_slice %31 {offsets = [0, 13], sizes = [8, 1], strides = [1, 1]} : vector<8x36xf32> to vector<8x1xf32>
    %97 = vector.broadcast %96 : vector<8x1xf32> to vector<8x256xf32>
    %98 = arith.mulf %97, %91 : vector<8x256xf32>
    %99 = arith.addf %81, %98 : vector<8x256xf32>
    %100 = vector.extract_strided_slice %31 {offsets = [0, 14], sizes = [8, 1], strides = [1, 1]} : vector<8x36xf32> to vector<8x1xf32>
    %101 = vector.broadcast %100 : vector<8x1xf32> to vector<8x256xf32>
    %102 = arith.mulf %101, %91 : vector<8x256xf32>
    %103 = arith.addf %85, %102 : vector<8x256xf32>
    %104 = vector.extract_strided_slice %31 {offsets = [0, 15], sizes = [8, 1], strides = [1, 1]} : vector<8x36xf32> to vector<8x1xf32>
    %105 = vector.broadcast %104 : vector<8x1xf32> to vector<8x256xf32>
    %106 = arith.mulf %105, %91 : vector<8x256xf32>
    %107 = arith.addf %89, %106 : vector<8x256xf32>
    %108 = vector.extract_strided_slice %36 {offsets = [0, 128], sizes = [8, 256], strides = [1, 1]} : vector<8x512xf32> to vector<8x256xf32>
    %109 = vector.extract_strided_slice %31 {offsets = [0, 16], sizes = [8, 1], strides = [1, 1]} : vector<8x36xf32> to vector<8x1xf32>
    %110 = vector.broadcast %109 : vector<8x1xf32> to vector<8x256xf32>
    %111 = arith.mulf %110, %108 : vector<8x256xf32>
    %112 = arith.addf %95, %111 : vector<8x256xf32>
    %113 = vector.extract_strided_slice %31 {offsets = [0, 17], sizes = [8, 1], strides = [1, 1]} : vector<8x36xf32> to vector<8x1xf32>
    %114 = vector.broadcast %113 : vector<8x1xf32> to vector<8x256xf32>
    %115 = arith.mulf %114, %108 : vector<8x256xf32>
    %116 = arith.addf %99, %115 : vector<8x256xf32>
    %117 = vector.extract_strided_slice %31 {offsets = [0, 18], sizes = [8, 1], strides = [1, 1]} : vector<8x36xf32> to vector<8x1xf32>
    %118 = vector.broadcast %117 : vector<8x1xf32> to vector<8x256xf32>
    %119 = arith.mulf %118, %108 : vector<8x256xf32>
    %120 = arith.addf %103, %119 : vector<8x256xf32>
    %121 = vector.extract_strided_slice %31 {offsets = [0, 19], sizes = [8, 1], strides = [1, 1]} : vector<8x36xf32> to vector<8x1xf32>
    %122 = vector.broadcast %121 : vector<8x1xf32> to vector<8x256xf32>
    %123 = arith.mulf %122, %108 : vector<8x256xf32>
    %124 = arith.addf %107, %123 : vector<8x256xf32>
    %125 = vector.extract_strided_slice %36 {offsets = [0, 129], sizes = [8, 256], strides = [1, 1]} : vector<8x512xf32> to vector<8x256xf32>
    %126 = arith.mulf %125, %29 : vector<8x256xf32>
    %127 = vector.extract_strided_slice %31 {offsets = [0, 20], sizes = [8, 1], strides = [1, 1]} : vector<8x36xf32> to vector<8x1xf32>
    %128 = vector.broadcast %127 : vector<8x1xf32> to vector<8x256xf32>
    %129 = arith.mulf %128, %126 : vector<8x256xf32>
    %130 = arith.addf %112, %129 : vector<8x256xf32>
    %131 = vector.extract_strided_slice %31 {offsets = [0, 21], sizes = [8, 1], strides = [1, 1]} : vector<8x36xf32> to vector<8x1xf32>
    %132 = vector.broadcast %131 : vector<8x1xf32> to vector<8x256xf32>
    %133 = arith.mulf %132, %126 : vector<8x256xf32>
    %134 = arith.addf %116, %133 : vector<8x256xf32>
    %135 = vector.extract_strided_slice %31 {offsets = [0, 22], sizes = [8, 1], strides = [1, 1]} : vector<8x36xf32> to vector<8x1xf32>
    %136 = vector.broadcast %135 : vector<8x1xf32> to vector<8x256xf32>
    %137 = arith.mulf %136, %126 : vector<8x256xf32>
    %138 = arith.addf %120, %137 : vector<8x256xf32>
    %139 = vector.extract_strided_slice %31 {offsets = [0, 23], sizes = [8, 1], strides = [1, 1]} : vector<8x36xf32> to vector<8x1xf32>
    %140 = vector.broadcast %139 : vector<8x1xf32> to vector<8x256xf32>
    %141 = arith.mulf %140, %126 : vector<8x256xf32>
    %142 = arith.addf %124, %141 : vector<8x256xf32>
    %143 = vector.extract_strided_slice %36 {offsets = [0, 143], sizes = [8, 256], strides = [1, 1]} : vector<8x512xf32> to vector<8x256xf32>
    %144 = arith.mulf %143, %23 : vector<8x256xf32>
    %145 = vector.extract_strided_slice %31 {offsets = [0, 24], sizes = [8, 1], strides = [1, 1]} : vector<8x36xf32> to vector<8x1xf32>
    %146 = vector.broadcast %145 : vector<8x1xf32> to vector<8x256xf32>
    %147 = arith.mulf %146, %144 : vector<8x256xf32>
    %148 = arith.addf %130, %147 : vector<8x256xf32>
    %149 = vector.extract_strided_slice %31 {offsets = [0, 25], sizes = [8, 1], strides = [1, 1]} : vector<8x36xf32> to vector<8x1xf32>
    %150 = vector.broadcast %149 : vector<8x1xf32> to vector<8x256xf32>
    %151 = arith.mulf %150, %144 : vector<8x256xf32>
    %152 = arith.addf %134, %151 : vector<8x256xf32>
    %153 = vector.extract_strided_slice %31 {offsets = [0, 26], sizes = [8, 1], strides = [1, 1]} : vector<8x36xf32> to vector<8x1xf32>
    %154 = vector.broadcast %153 : vector<8x1xf32> to vector<8x256xf32>
    %155 = arith.mulf %154, %144 : vector<8x256xf32>
    %156 = arith.addf %138, %155 : vector<8x256xf32>
    %157 = vector.extract_strided_slice %31 {offsets = [0, 27], sizes = [8, 1], strides = [1, 1]} : vector<8x36xf32> to vector<8x1xf32>
    %158 = vector.broadcast %157 : vector<8x1xf32> to vector<8x256xf32>
    %159 = arith.mulf %158, %144 : vector<8x256xf32>
    %160 = arith.addf %142, %159 : vector<8x256xf32>
    %161 = vector.extract_strided_slice %36 {offsets = [0, 144], sizes = [8, 256], strides = [1, 1]} : vector<8x512xf32> to vector<8x256xf32>
    %162 = vector.extract_strided_slice %31 {offsets = [0, 28], sizes = [8, 1], strides = [1, 1]} : vector<8x36xf32> to vector<8x1xf32>
    %163 = vector.broadcast %162 : vector<8x1xf32> to vector<8x256xf32>
    %164 = arith.mulf %163, %161 : vector<8x256xf32>
    %165 = arith.addf %148, %164 : vector<8x256xf32>
    %166 = vector.extract_strided_slice %31 {offsets = [0, 29], sizes = [8, 1], strides = [1, 1]} : vector<8x36xf32> to vector<8x1xf32>
    %167 = vector.broadcast %166 : vector<8x1xf32> to vector<8x256xf32>
    %168 = arith.mulf %167, %161 : vector<8x256xf32>
    %169 = arith.addf %152, %168 : vector<8x256xf32>
    %170 = vector.extract_strided_slice %31 {offsets = [0, 30], sizes = [8, 1], strides = [1, 1]} : vector<8x36xf32> to vector<8x1xf32>
    %171 = vector.broadcast %170 : vector<8x1xf32> to vector<8x256xf32>
    %172 = arith.mulf %171, %161 : vector<8x256xf32>
    %173 = arith.addf %156, %172 : vector<8x256xf32>
    %174 = vector.extract_strided_slice %31 {offsets = [0, 31], sizes = [8, 1], strides = [1, 1]} : vector<8x36xf32> to vector<8x1xf32>
    %175 = vector.broadcast %174 : vector<8x1xf32> to vector<8x256xf32>
    %176 = arith.mulf %175, %161 : vector<8x256xf32>
    %177 = arith.addf %160, %176 : vector<8x256xf32>
    %178 = vector.extract_strided_slice %36 {offsets = [0, 145], sizes = [8, 256], strides = [1, 1]} : vector<8x512xf32> to vector<8x256xf32>
    %179 = arith.mulf %178, %29 : vector<8x256xf32>
    %180 = vector.extract_strided_slice %31 {offsets = [0, 32], sizes = [8, 1], strides = [1, 1]} : vector<8x36xf32> to vector<8x1xf32>
    %181 = vector.broadcast %180 : vector<8x1xf32> to vector<8x256xf32>
    %182 = arith.mulf %181, %179 : vector<8x256xf32>
    %183 = arith.addf %165, %182 : vector<8x256xf32>
    %184 = vector.extract_strided_slice %31 {offsets = [0, 33], sizes = [8, 1], strides = [1, 1]} : vector<8x36xf32> to vector<8x1xf32>
    %185 = vector.broadcast %184 : vector<8x1xf32> to vector<8x256xf32>
    %186 = arith.mulf %185, %179 : vector<8x256xf32>
    %187 = arith.addf %169, %186 : vector<8x256xf32>
    %188 = vector.extract_strided_slice %31 {offsets = [0, 34], sizes = [8, 1], strides = [1, 1]} : vector<8x36xf32> to vector<8x1xf32>
    %189 = vector.broadcast %188 : vector<8x1xf32> to vector<8x256xf32>
    %190 = arith.mulf %189, %179 : vector<8x256xf32>
    %191 = arith.addf %173, %190 : vector<8x256xf32>
    %192 = vector.extract_strided_slice %31 {offsets = [0, 35], sizes = [8, 1], strides = [1, 1]} : vector<8x36xf32> to vector<8x1xf32>
    %193 = vector.broadcast %192 : vector<8x1xf32> to vector<8x256xf32>
    %194 = arith.mulf %193, %179 : vector<8x256xf32>
    %195 = arith.addf %177, %194 : vector<8x256xf32>
    %196 = vector.extract_strided_slice %183 {offsets = [0, 0], sizes = [4, 256], strides = [1, 1]} : vector<8x256xf32> to vector<4x256xf32>
    %cst_11 = arith.constant dense<0.000000e+00> : vector<256xf32>
    %197 = vector.multi_reduction <add>, %196, %cst_11 [0] : vector<4x256xf32> to vector<256xf32>
    %198 = vector.shape_cast %197 : vector<256xf32> to vector<1x256xf32>
    %199 = vector.extract_strided_slice %187 {offsets = [0, 0], sizes = [4, 256], strides = [1, 1]} : vector<8x256xf32> to vector<4x256xf32>
    %cst_12 = arith.constant dense<0.000000e+00> : vector<256xf32>
    %200 = vector.multi_reduction <add>, %199, %cst_12 [0] : vector<4x256xf32> to vector<256xf32>
    %201 = vector.shape_cast %200 : vector<256xf32> to vector<1x256xf32>
    %202 = vector.extract_strided_slice %191 {offsets = [0, 0], sizes = [4, 256], strides = [1, 1]} : vector<8x256xf32> to vector<4x256xf32>
    %cst_13 = arith.constant dense<0.000000e+00> : vector<256xf32>
    %203 = vector.multi_reduction <add>, %202, %cst_13 [0] : vector<4x256xf32> to vector<256xf32>
    %204 = vector.shape_cast %203 : vector<256xf32> to vector<1x256xf32>
    %205 = vector.extract_strided_slice %195 {offsets = [0, 0], sizes = [4, 256], strides = [1, 1]} : vector<8x256xf32> to vector<4x256xf32>
    %cst_14 = arith.constant dense<0.000000e+00> : vector<256xf32>
    %206 = vector.multi_reduction <add>, %205, %cst_14 [0] : vector<4x256xf32> to vector<256xf32>
    %207 = vector.shape_cast %206 : vector<256xf32> to vector<1x256xf32>
    %208 = vector.extract_strided_slice %183 {offsets = [4, 0], sizes = [4, 256], strides = [1, 1]} : vector<8x256xf32> to vector<4x256xf32>
    %cst_15 = arith.constant dense<0.000000e+00> : vector<256xf32>
    %209 = vector.multi_reduction <add>, %208, %cst_15 [0] : vector<4x256xf32> to vector<256xf32>
    %210 = vector.shape_cast %209 : vector<256xf32> to vector<1x256xf32>
    %211 = vector.extract_strided_slice %187 {offsets = [4, 0], sizes = [4, 256], strides = [1, 1]} : vector<8x256xf32> to vector<4x256xf32>
    %cst_16 = arith.constant dense<0.000000e+00> : vector<256xf32>
    %212 = vector.multi_reduction <add>, %211, %cst_16 [0] : vector<4x256xf32> to vector<256xf32>
    %213 = vector.shape_cast %212 : vector<256xf32> to vector<1x256xf32>
    %214 = vector.extract_strided_slice %191 {offsets = [4, 0], sizes = [4, 256], strides = [1, 1]} : vector<8x256xf32> to vector<4x256xf32>
    %cst_17 = arith.constant dense<0.000000e+00> : vector<256xf32>
    %215 = vector.multi_reduction <add>, %214, %cst_17 [0] : vector<4x256xf32> to vector<256xf32>
    %216 = vector.shape_cast %215 : vector<256xf32> to vector<1x256xf32>
    %217 = vector.extract_strided_slice %195 {offsets = [4, 0], sizes = [4, 256], strides = [1, 1]} : vector<8x256xf32> to vector<4x256xf32>
    %cst_18 = arith.constant dense<0.000000e+00> : vector<256xf32>
    %218 = vector.multi_reduction <add>, %217, %cst_18 [0] : vector<4x256xf32> to vector<256xf32>
    %219 = vector.shape_cast %218 : vector<256xf32> to vector<1x256xf32>
    %220 = tpu.concatenate %198, %201, %204, %207, %210, %213, %216, %219 in 0 : vector<1x256xf32>, vector<1x256xf32>, vector<1x256xf32>, vector<1x256xf32>, vector<1x256xf32>, vector<1x256xf32>, vector<1x256xf32>, vector<1x256xf32> -> vector<8x256xf32>
    %c0_19 = arith.constant 0 : index
    %c0_20 = arith.constant 0 : index
    %221 = vector.load %arg3[%c0_19, %c0_20] : memref<8x1xf32, #tpu.memory_space<vmem>>, vector<8x1xf32>
    %c0_21 = arith.constant 0 : index
    %c0_22 = arith.constant 0 : index
    %222 = vector.load %arg4[%c0_21, %c0_22] : memref<8x1xf32, #tpu.memory_space<vmem>>, vector<8x1xf32>
    %cst_23 = arith.constant dense<0.000000e+00> : vector<8xf32>
    %223 = vector.multi_reduction <add>, %220, %cst_23 [1] : vector<8x256xf32> to vector<8xf32>
    %224 = vector.shape_cast %223 : vector<8xf32> to vector<8x1xf32>
    %225 = vector.extract_strided_slice %224 {offsets = [0, 0], sizes = [4, 1], strides = [1, 1]} : vector<8x1xf32> to vector<4x1xf32>
    %226 = vector.extract_strided_slice %224 {offsets = [4, 0], sizes = [4, 1], strides = [1, 1]} : vector<8x1xf32> to vector<4x1xf32>
    %227 = arith.addf %225, %226 : vector<4x1xf32>
    %228 = tpu.concatenate %227, %227 in 0 : vector<4x1xf32>, vector<4x1xf32> -> vector<8x1xf32>
    %cst_24 = arith.constant 0.001953125 : f32
    %229 = vector.broadcast %cst_24 : f32 to vector<8x1xf32>
    %230 = arith.mulf %228, %229 : vector<8x1xf32>
    %231 = vector.broadcast %230 : vector<8x1xf32> to vector<8x256xf32>
    %232 = arith.subf %220, %231 : vector<8x256xf32>
    %233 = arith.mulf %232, %232 : vector<8x256xf32>
    %cst_25 = arith.constant dense<0.000000e+00> : vector<8xf32>
    %234 = vector.multi_reduction <add>, %233, %cst_25 [1] : vector<8x256xf32> to vector<8xf32>
    %235 = vector.shape_cast %234 : vector<8xf32> to vector<8x1xf32>
    %236 = vector.extract_strided_slice %235 {offsets = [0, 0], sizes = [4, 1], strides = [1, 1]} : vector<8x1xf32> to vector<4x1xf32>
    %237 = vector.extract_strided_slice %235 {offsets = [4, 0], sizes = [4, 1], strides = [1, 1]} : vector<8x1xf32> to vector<4x1xf32>
    %238 = arith.addf %236, %237 : vector<4x1xf32>
    %239 = tpu.concatenate %238, %238 in 0 : vector<4x1xf32>, vector<4x1xf32> -> vector<8x1xf32>
    %cst_26 = arith.constant 0.001953125 : f32
    %240 = vector.broadcast %cst_26 : f32 to vector<8x1xf32>
    %241 = arith.mulf %239, %240 : vector<8x1xf32>
    %cst_27 = arith.constant 9.99999974E-6 : f32
    %242 = vector.broadcast %cst_27 : f32 to vector<8x1xf32>
    %243 = arith.addf %241, %242 : vector<8x1xf32>
    %244 = math.rsqrt %243 : vector<8x1xf32>
    %245 = arith.mulf %244, %221 : vector<8x1xf32>
    %246 = vector.broadcast %245 : vector<8x1xf32> to vector<8x256xf32>
    %247 = arith.mulf %232, %246 : vector<8x256xf32>
    %248 = vector.broadcast %222 : vector<8x1xf32> to vector<8x256xf32>
    %249 = arith.addf %247, %248 : vector<8x256xf32>
    %cst_28 = arith.constant 0.000000e+00 : f32
    %250 = vector.broadcast %cst_28 : f32 to vector<8x256xf32>
    %251 = arith.cmpf oge, %249, %250 : vector<8x256xf32>
    %cst_29 = arith.constant 0.00999999977 : f32
    %252 = vector.broadcast %cst_29 : f32 to vector<8x256xf32>
    %253 = arith.mulf %252, %249 : vector<8x256xf32>
    %254 = arith.select %251, %249, %253 : vector<8x256xi1>, vector<8x256xf32>
    %c0_30 = arith.constant 0 : index
    %c0_31 = arith.constant 0 : index
    %255 = vector.load %arg2[%c0_30, %c0_31] : memref<8x36xf32, #tpu.memory_space<vmem>>, vector<8x36xf32>
    %cst_32 = arith.constant 0.000000e+00 : f32
    %256 = vector.broadcast %cst_32 : f32 to vector<8x256xf32>
    %cst_33 = arith.constant 0.000000e+00 : f32
    %257 = vector.broadcast %cst_33 : f32 to vector<8x256xf32>
    %cst_34 = arith.constant 0.000000e+00 : f32
    %258 = vector.broadcast %cst_34 : f32 to vector<8x256xf32>
    %cst_35 = arith.constant 0.000000e+00 : f32
    %259 = vector.broadcast %cst_35 : f32 to vector<8x256xf32>
    %260 = tpu.concatenate %30, %254, %30 in 1 : vector<8x128xf32>, vector<8x256xf32>, vector<8x128xf32> -> vector<8x512xf32>
    %261 = vector.extract_strided_slice %260 {offsets = [0, 111], sizes = [8, 256], strides = [1, 1]} : vector<8x512xf32> to vector<8x256xf32>
    %262 = arith.mulf %261, %23 : vector<8x256xf32>
    %263 = vector.extract_strided_slice %255 {offsets = [0, 0], sizes = [8, 1], strides = [1, 1]} : vector<8x36xf32> to vector<8x1xf32>
    %264 = vector.broadcast %263 : vector<8x1xf32> to vector<8x256xf32>
    %265 = arith.mulf %264, %262 : vector<8x256xf32>
    %266 = arith.addf %256, %265 : vector<8x256xf32>
    %267 = vector.extract_strided_slice %255 {offsets = [0, 1], sizes = [8, 1], strides = [1, 1]} : vector<8x36xf32> to vector<8x1xf32>
    %268 = vector.broadcast %267 : vector<8x1xf32> to vector<8x256xf32>
    %269 = arith.mulf %268, %262 : vector<8x256xf32>
    %270 = arith.addf %257, %269 : vector<8x256xf32>
    %271 = vector.extract_strided_slice %255 {offsets = [0, 2], sizes = [8, 1], strides = [1, 1]} : vector<8x36xf32> to vector<8x1xf32>
    %272 = vector.broadcast %271 : vector<8x1xf32> to vector<8x256xf32>
    %273 = arith.mulf %272, %262 : vector<8x256xf32>
    %274 = arith.addf %258, %273 : vector<8x256xf32>
    %275 = vector.extract_strided_slice %255 {offsets = [0, 3], sizes = [8, 1], strides = [1, 1]} : vector<8x36xf32> to vector<8x1xf32>
    %276 = vector.broadcast %275 : vector<8x1xf32> to vector<8x256xf32>
    %277 = arith.mulf %276, %262 : vector<8x256xf32>
    %278 = arith.addf %259, %277 : vector<8x256xf32>
    %279 = vector.extract_strided_slice %260 {offsets = [0, 112], sizes = [8, 256], strides = [1, 1]} : vector<8x512xf32> to vector<8x256xf32>
    %280 = vector.extract_strided_slice %255 {offsets = [0, 4], sizes = [8, 1], strides = [1, 1]} : vector<8x36xf32> to vector<8x1xf32>
    %281 = vector.broadcast %280 : vector<8x1xf32> to vector<8x256xf32>
    %282 = arith.mulf %281, %279 : vector<8x256xf32>
    %283 = arith.addf %266, %282 : vector<8x256xf32>
    %284 = vector.extract_strided_slice %255 {offsets = [0, 5], sizes = [8, 1], strides = [1, 1]} : vector<8x36xf32> to vector<8x1xf32>
    %285 = vector.broadcast %284 : vector<8x1xf32> to vector<8x256xf32>
    %286 = arith.mulf %285, %279 : vector<8x256xf32>
    %287 = arith.addf %270, %286 : vector<8x256xf32>
    %288 = vector.extract_strided_slice %255 {offsets = [0, 6], sizes = [8, 1], strides = [1, 1]} : vector<8x36xf32> to vector<8x1xf32>
    %289 = vector.broadcast %288 : vector<8x1xf32> to vector<8x256xf32>
    %290 = arith.mulf %289, %279 : vector<8x256xf32>
    %291 = arith.addf %274, %290 : vector<8x256xf32>
    %292 = vector.extract_strided_slice %255 {offsets = [0, 7], sizes = [8, 1], strides = [1, 1]} : vector<8x36xf32> to vector<8x1xf32>
    %293 = vector.broadcast %292 : vector<8x1xf32> to vector<8x256xf32>
    %294 = arith.mulf %293, %279 : vector<8x256xf32>
    %295 = arith.addf %278, %294 : vector<8x256xf32>
    %296 = vector.extract_strided_slice %260 {offsets = [0, 113], sizes = [8, 256], strides = [1, 1]} : vector<8x512xf32> to vector<8x256xf32>
    %297 = arith.mulf %296, %29 : vector<8x256xf32>
    %298 = vector.extract_strided_slice %255 {offsets = [0, 8], sizes = [8, 1], strides = [1, 1]} : vector<8x36xf32> to vector<8x1xf32>
    %299 = vector.broadcast %298 : vector<8x1xf32> to vector<8x256xf32>
    %300 = arith.mulf %299, %297 : vector<8x256xf32>
    %301 = arith.addf %283, %300 : vector<8x256xf32>
    %302 = vector.extract_strided_slice %255 {offsets = [0, 9], sizes = [8, 1], strides = [1, 1]} : vector<8x36xf32> to vector<8x1xf32>
    %303 = vector.broadcast %302 : vector<8x1xf32> to vector<8x256xf32>
    %304 = arith.mulf %303, %297 : vector<8x256xf32>
    %305 = arith.addf %287, %304 : vector<8x256xf32>
    %306 = vector.extract_strided_slice %255 {offsets = [0, 10], sizes = [8, 1], strides = [1, 1]} : vector<8x36xf32> to vector<8x1xf32>
    %307 = vector.broadcast %306 : vector<8x1xf32> to vector<8x256xf32>
    %308 = arith.mulf %307, %297 : vector<8x256xf32>
    %309 = arith.addf %291, %308 : vector<8x256xf32>
    %310 = vector.extract_strided_slice %255 {offsets = [0, 11], sizes = [8, 1], strides = [1, 1]} : vector<8x36xf32> to vector<8x1xf32>
    %311 = vector.broadcast %310 : vector<8x1xf32> to vector<8x256xf32>
    %312 = arith.mulf %311, %297 : vector<8x256xf32>
    %313 = arith.addf %295, %312 : vector<8x256xf32>
    %314 = vector.extract_strided_slice %260 {offsets = [0, 127], sizes = [8, 256], strides = [1, 1]} : vector<8x512xf32> to vector<8x256xf32>
    %315 = arith.mulf %314, %23 : vector<8x256xf32>
    %316 = vector.extract_strided_slice %255 {offsets = [0, 12], sizes = [8, 1], strides = [1, 1]} : vector<8x36xf32> to vector<8x1xf32>
    %317 = vector.broadcast %316 : vector<8x1xf32> to vector<8x256xf32>
    %318 = arith.mulf %317, %315 : vector<8x256xf32>
    %319 = arith.addf %301, %318 : vector<8x256xf32>
    %320 = vector.extract_strided_slice %255 {offsets = [0, 13], sizes = [8, 1], strides = [1, 1]} : vector<8x36xf32> to vector<8x1xf32>
    %321 = vector.broadcast %320 : vector<8x1xf32> to vector<8x256xf32>
    %322 = arith.mulf %321, %315 : vector<8x256xf32>
    %323 = arith.addf %305, %322 : vector<8x256xf32>
    %324 = vector.extract_strided_slice %255 {offsets = [0, 14], sizes = [8, 1], strides = [1, 1]} : vector<8x36xf32> to vector<8x1xf32>
    %325 = vector.broadcast %324 : vector<8x1xf32> to vector<8x256xf32>
    %326 = arith.mulf %325, %315 : vector<8x256xf32>
    %327 = arith.addf %309, %326 : vector<8x256xf32>
    %328 = vector.extract_strided_slice %255 {offsets = [0, 15], sizes = [8, 1], strides = [1, 1]} : vector<8x36xf32> to vector<8x1xf32>
    %329 = vector.broadcast %328 : vector<8x1xf32> to vector<8x256xf32>
    %330 = arith.mulf %329, %315 : vector<8x256xf32>
    %331 = arith.addf %313, %330 : vector<8x256xf32>
    %332 = vector.extract_strided_slice %260 {offsets = [0, 128], sizes = [8, 256], strides = [1, 1]} : vector<8x512xf32> to vector<8x256xf32>
    %333 = vector.extract_strided_slice %255 {offsets = [0, 16], sizes = [8, 1], strides = [1, 1]} : vector<8x36xf32> to vector<8x1xf32>
    %334 = vector.broadcast %333 : vector<8x1xf32> to vector<8x256xf32>
    %335 = arith.mulf %334, %332 : vector<8x256xf32>
    %336 = arith.addf %319, %335 : vector<8x256xf32>
    %337 = vector.extract_strided_slice %255 {offsets = [0, 17], sizes = [8, 1], strides = [1, 1]} : vector<8x36xf32> to vector<8x1xf32>
    %338 = vector.broadcast %337 : vector<8x1xf32> to vector<8x256xf32>
    %339 = arith.mulf %338, %332 : vector<8x256xf32>
    %340 = arith.addf %323, %339 : vector<8x256xf32>
    %341 = vector.extract_strided_slice %255 {offsets = [0, 18], sizes = [8, 1], strides = [1, 1]} : vector<8x36xf32> to vector<8x1xf32>
    %342 = vector.broadcast %341 : vector<8x1xf32> to vector<8x256xf32>
    %343 = arith.mulf %342, %332 : vector<8x256xf32>
    %344 = arith.addf %327, %343 : vector<8x256xf32>
    %345 = vector.extract_strided_slice %255 {offsets = [0, 19], sizes = [8, 1], strides = [1, 1]} : vector<8x36xf32> to vector<8x1xf32>
    %346 = vector.broadcast %345 : vector<8x1xf32> to vector<8x256xf32>
    %347 = arith.mulf %346, %332 : vector<8x256xf32>
    %348 = arith.addf %331, %347 : vector<8x256xf32>
    %349 = vector.extract_strided_slice %260 {offsets = [0, 129], sizes = [8, 256], strides = [1, 1]} : vector<8x512xf32> to vector<8x256xf32>
    %350 = arith.mulf %349, %29 : vector<8x256xf32>
    %351 = vector.extract_strided_slice %255 {offsets = [0, 20], sizes = [8, 1], strides = [1, 1]} : vector<8x36xf32> to vector<8x1xf32>
    %352 = vector.broadcast %351 : vector<8x1xf32> to vector<8x256xf32>
    %353 = arith.mulf %352, %350 : vector<8x256xf32>
    %354 = arith.addf %336, %353 : vector<8x256xf32>
    %355 = vector.extract_strided_slice %255 {offsets = [0, 21], sizes = [8, 1], strides = [1, 1]} : vector<8x36xf32> to vector<8x1xf32>
    %356 = vector.broadcast %355 : vector<8x1xf32> to vector<8x256xf32>
    %357 = arith.mulf %356, %350 : vector<8x256xf32>
    %358 = arith.addf %340, %357 : vector<8x256xf32>
    %359 = vector.extract_strided_slice %255 {offsets = [0, 22], sizes = [8, 1], strides = [1, 1]} : vector<8x36xf32> to vector<8x1xf32>
    %360 = vector.broadcast %359 : vector<8x1xf32> to vector<8x256xf32>
    %361 = arith.mulf %360, %350 : vector<8x256xf32>
    %362 = arith.addf %344, %361 : vector<8x256xf32>
    %363 = vector.extract_strided_slice %255 {offsets = [0, 23], sizes = [8, 1], strides = [1, 1]} : vector<8x36xf32> to vector<8x1xf32>
    %364 = vector.broadcast %363 : vector<8x1xf32> to vector<8x256xf32>
    %365 = arith.mulf %364, %350 : vector<8x256xf32>
    %366 = arith.addf %348, %365 : vector<8x256xf32>
    %367 = vector.extract_strided_slice %260 {offsets = [0, 143], sizes = [8, 256], strides = [1, 1]} : vector<8x512xf32> to vector<8x256xf32>
    %368 = arith.mulf %367, %23 : vector<8x256xf32>
    %369 = vector.extract_strided_slice %255 {offsets = [0, 24], sizes = [8, 1], strides = [1, 1]} : vector<8x36xf32> to vector<8x1xf32>
    %370 = vector.broadcast %369 : vector<8x1xf32> to vector<8x256xf32>
    %371 = arith.mulf %370, %368 : vector<8x256xf32>
    %372 = arith.addf %354, %371 : vector<8x256xf32>
    %373 = vector.extract_strided_slice %255 {offsets = [0, 25], sizes = [8, 1], strides = [1, 1]} : vector<8x36xf32> to vector<8x1xf32>
    %374 = vector.broadcast %373 : vector<8x1xf32> to vector<8x256xf32>
    %375 = arith.mulf %374, %368 : vector<8x256xf32>
    %376 = arith.addf %358, %375 : vector<8x256xf32>
    %377 = vector.extract_strided_slice %255 {offsets = [0, 26], sizes = [8, 1], strides = [1, 1]} : vector<8x36xf32> to vector<8x1xf32>
    %378 = vector.broadcast %377 : vector<8x1xf32> to vector<8x256xf32>
    %379 = arith.mulf %378, %368 : vector<8x256xf32>
    %380 = arith.addf %362, %379 : vector<8x256xf32>
    %381 = vector.extract_strided_slice %255 {offsets = [0, 27], sizes = [8, 1], strides = [1, 1]} : vector<8x36xf32> to vector<8x1xf32>
    %382 = vector.broadcast %381 : vector<8x1xf32> to vector<8x256xf32>
    %383 = arith.mulf %382, %368 : vector<8x256xf32>
    %384 = arith.addf %366, %383 : vector<8x256xf32>
    %385 = vector.extract_strided_slice %260 {offsets = [0, 144], sizes = [8, 256], strides = [1, 1]} : vector<8x512xf32> to vector<8x256xf32>
    %386 = vector.extract_strided_slice %255 {offsets = [0, 28], sizes = [8, 1], strides = [1, 1]} : vector<8x36xf32> to vector<8x1xf32>
    %387 = vector.broadcast %386 : vector<8x1xf32> to vector<8x256xf32>
    %388 = arith.mulf %387, %385 : vector<8x256xf32>
    %389 = arith.addf %372, %388 : vector<8x256xf32>
    %390 = vector.extract_strided_slice %255 {offsets = [0, 29], sizes = [8, 1], strides = [1, 1]} : vector<8x36xf32> to vector<8x1xf32>
    %391 = vector.broadcast %390 : vector<8x1xf32> to vector<8x256xf32>
    %392 = arith.mulf %391, %385 : vector<8x256xf32>
    %393 = arith.addf %376, %392 : vector<8x256xf32>
    %394 = vector.extract_strided_slice %255 {offsets = [0, 30], sizes = [8, 1], strides = [1, 1]} : vector<8x36xf32> to vector<8x1xf32>
    %395 = vector.broadcast %394 : vector<8x1xf32> to vector<8x256xf32>
    %396 = arith.mulf %395, %385 : vector<8x256xf32>
    %397 = arith.addf %380, %396 : vector<8x256xf32>
    %398 = vector.extract_strided_slice %255 {offsets = [0, 31], sizes = [8, 1], strides = [1, 1]} : vector<8x36xf32> to vector<8x1xf32>
    %399 = vector.broadcast %398 : vector<8x1xf32> to vector<8x256xf32>
    %400 = arith.mulf %399, %385 : vector<8x256xf32>
    %401 = arith.addf %384, %400 : vector<8x256xf32>
    %402 = vector.extract_strided_slice %260 {offsets = [0, 145], sizes = [8, 256], strides = [1, 1]} : vector<8x512xf32> to vector<8x256xf32>
    %403 = arith.mulf %402, %29 : vector<8x256xf32>
    %404 = vector.extract_strided_slice %255 {offsets = [0, 32], sizes = [8, 1], strides = [1, 1]} : vector<8x36xf32> to vector<8x1xf32>
    %405 = vector.broadcast %404 : vector<8x1xf32> to vector<8x256xf32>
    %406 = arith.mulf %405, %403 : vector<8x256xf32>
    %407 = arith.addf %389, %406 : vector<8x256xf32>
    %408 = vector.extract_strided_slice %255 {offsets = [0, 33], sizes = [8, 1], strides = [1, 1]} : vector<8x36xf32> to vector<8x1xf32>
    %409 = vector.broadcast %408 : vector<8x1xf32> to vector<8x256xf32>
    %410 = arith.mulf %409, %403 : vector<8x256xf32>
    %411 = arith.addf %393, %410 : vector<8x256xf32>
    %412 = vector.extract_strided_slice %255 {offsets = [0, 34], sizes = [8, 1], strides = [1, 1]} : vector<8x36xf32> to vector<8x1xf32>
    %413 = vector.broadcast %412 : vector<8x1xf32> to vector<8x256xf32>
    %414 = arith.mulf %413, %403 : vector<8x256xf32>
    %415 = arith.addf %397, %414 : vector<8x256xf32>
    %416 = vector.extract_strided_slice %255 {offsets = [0, 35], sizes = [8, 1], strides = [1, 1]} : vector<8x36xf32> to vector<8x1xf32>
    %417 = vector.broadcast %416 : vector<8x1xf32> to vector<8x256xf32>
    %418 = arith.mulf %417, %403 : vector<8x256xf32>
    %419 = arith.addf %401, %418 : vector<8x256xf32>
    %420 = vector.extract_strided_slice %407 {offsets = [0, 0], sizes = [4, 256], strides = [1, 1]} : vector<8x256xf32> to vector<4x256xf32>
    %cst_36 = arith.constant dense<0.000000e+00> : vector<256xf32>
    %421 = vector.multi_reduction <add>, %420, %cst_36 [0] : vector<4x256xf32> to vector<256xf32>
    %422 = vector.shape_cast %421 : vector<256xf32> to vector<1x256xf32>
    %423 = vector.extract_strided_slice %411 {offsets = [0, 0], sizes = [4, 256], strides = [1, 1]} : vector<8x256xf32> to vector<4x256xf32>
    %cst_37 = arith.constant dense<0.000000e+00> : vector<256xf32>
    %424 = vector.multi_reduction <add>, %423, %cst_37 [0] : vector<4x256xf32> to vector<256xf32>
    %425 = vector.shape_cast %424 : vector<256xf32> to vector<1x256xf32>
    %426 = vector.extract_strided_slice %415 {offsets = [0, 0], sizes = [4, 256], strides = [1, 1]} : vector<8x256xf32> to vector<4x256xf32>
    %cst_38 = arith.constant dense<0.000000e+00> : vector<256xf32>
    %427 = vector.multi_reduction <add>, %426, %cst_38 [0] : vector<4x256xf32> to vector<256xf32>
    %428 = vector.shape_cast %427 : vector<256xf32> to vector<1x256xf32>
    %429 = vector.extract_strided_slice %419 {offsets = [0, 0], sizes = [4, 256], strides = [1, 1]} : vector<8x256xf32> to vector<4x256xf32>
    %cst_39 = arith.constant dense<0.000000e+00> : vector<256xf32>
    %430 = vector.multi_reduction <add>, %429, %cst_39 [0] : vector<4x256xf32> to vector<256xf32>
    %431 = vector.shape_cast %430 : vector<256xf32> to vector<1x256xf32>
    %432 = vector.extract_strided_slice %407 {offsets = [4, 0], sizes = [4, 256], strides = [1, 1]} : vector<8x256xf32> to vector<4x256xf32>
    %cst_40 = arith.constant dense<0.000000e+00> : vector<256xf32>
    %433 = vector.multi_reduction <add>, %432, %cst_40 [0] : vector<4x256xf32> to vector<256xf32>
    %434 = vector.shape_cast %433 : vector<256xf32> to vector<1x256xf32>
    %435 = vector.extract_strided_slice %411 {offsets = [4, 0], sizes = [4, 256], strides = [1, 1]} : vector<8x256xf32> to vector<4x256xf32>
    %cst_41 = arith.constant dense<0.000000e+00> : vector<256xf32>
    %436 = vector.multi_reduction <add>, %435, %cst_41 [0] : vector<4x256xf32> to vector<256xf32>
    %437 = vector.shape_cast %436 : vector<256xf32> to vector<1x256xf32>
    %438 = vector.extract_strided_slice %415 {offsets = [4, 0], sizes = [4, 256], strides = [1, 1]} : vector<8x256xf32> to vector<4x256xf32>
    %cst_42 = arith.constant dense<0.000000e+00> : vector<256xf32>
    %439 = vector.multi_reduction <add>, %438, %cst_42 [0] : vector<4x256xf32> to vector<256xf32>
    %440 = vector.shape_cast %439 : vector<256xf32> to vector<1x256xf32>
    %441 = vector.extract_strided_slice %419 {offsets = [4, 0], sizes = [4, 256], strides = [1, 1]} : vector<8x256xf32> to vector<4x256xf32>
    %cst_43 = arith.constant dense<0.000000e+00> : vector<256xf32>
    %442 = vector.multi_reduction <add>, %441, %cst_43 [0] : vector<4x256xf32> to vector<256xf32>
    %443 = vector.shape_cast %442 : vector<256xf32> to vector<1x256xf32>
    %444 = tpu.concatenate %422, %425, %428, %431, %434, %437, %440, %443 in 0 : vector<1x256xf32>, vector<1x256xf32>, vector<1x256xf32>, vector<1x256xf32>, vector<1x256xf32>, vector<1x256xf32>, vector<1x256xf32>, vector<1x256xf32> -> vector<8x256xf32>
    %c0_44 = arith.constant 0 : index
    %c0_45 = arith.constant 0 : index
    %445 = vector.load %arg5[%c0_44, %c0_45] : memref<8x1xf32, #tpu.memory_space<vmem>>, vector<8x1xf32>
    %c0_46 = arith.constant 0 : index
    %c0_47 = arith.constant 0 : index
    %446 = vector.load %arg6[%c0_46, %c0_47] : memref<8x1xf32, #tpu.memory_space<vmem>>, vector<8x1xf32>
    %cst_48 = arith.constant dense<0.000000e+00> : vector<8xf32>
    %447 = vector.multi_reduction <add>, %444, %cst_48 [1] : vector<8x256xf32> to vector<8xf32>
    %448 = vector.shape_cast %447 : vector<8xf32> to vector<8x1xf32>
    %449 = vector.extract_strided_slice %448 {offsets = [0, 0], sizes = [4, 1], strides = [1, 1]} : vector<8x1xf32> to vector<4x1xf32>
    %450 = vector.extract_strided_slice %448 {offsets = [4, 0], sizes = [4, 1], strides = [1, 1]} : vector<8x1xf32> to vector<4x1xf32>
    %451 = arith.addf %449, %450 : vector<4x1xf32>
    %452 = tpu.concatenate %451, %451 in 0 : vector<4x1xf32>, vector<4x1xf32> -> vector<8x1xf32>
    %cst_49 = arith.constant 0.001953125 : f32
    %453 = vector.broadcast %cst_49 : f32 to vector<8x1xf32>
    %454 = arith.mulf %452, %453 : vector<8x1xf32>
    %455 = vector.broadcast %454 : vector<8x1xf32> to vector<8x256xf32>
    %456 = arith.subf %444, %455 : vector<8x256xf32>
    %457 = arith.mulf %456, %456 : vector<8x256xf32>
    %cst_50 = arith.constant dense<0.000000e+00> : vector<8xf32>
    %458 = vector.multi_reduction <add>, %457, %cst_50 [1] : vector<8x256xf32> to vector<8xf32>
    %459 = vector.shape_cast %458 : vector<8xf32> to vector<8x1xf32>
    %460 = vector.extract_strided_slice %459 {offsets = [0, 0], sizes = [4, 1], strides = [1, 1]} : vector<8x1xf32> to vector<4x1xf32>
    %461 = vector.extract_strided_slice %459 {offsets = [4, 0], sizes = [4, 1], strides = [1, 1]} : vector<8x1xf32> to vector<4x1xf32>
    %462 = arith.addf %460, %461 : vector<4x1xf32>
    %463 = tpu.concatenate %462, %462 in 0 : vector<4x1xf32>, vector<4x1xf32> -> vector<8x1xf32>
    %cst_51 = arith.constant 0.001953125 : f32
    %464 = vector.broadcast %cst_51 : f32 to vector<8x1xf32>
    %465 = arith.mulf %463, %464 : vector<8x1xf32>
    %cst_52 = arith.constant 9.99999974E-6 : f32
    %466 = vector.broadcast %cst_52 : f32 to vector<8x1xf32>
    %467 = arith.addf %465, %466 : vector<8x1xf32>
    %468 = math.rsqrt %467 : vector<8x1xf32>
    %469 = arith.mulf %468, %445 : vector<8x1xf32>
    %470 = vector.broadcast %469 : vector<8x1xf32> to vector<8x256xf32>
    %471 = arith.mulf %456, %470 : vector<8x256xf32>
    %472 = vector.broadcast %446 : vector<8x1xf32> to vector<8x256xf32>
    %473 = arith.addf %471, %472 : vector<8x256xf32>
    %474 = arith.addf %473, %0 : vector<8x256xf32>
    %cst_53 = arith.constant 0.000000e+00 : f32
    %475 = vector.broadcast %cst_53 : f32 to vector<8x256xf32>
    %476 = arith.cmpf oge, %474, %475 : vector<8x256xf32>
    %cst_54 = arith.constant 0.00999999977 : f32
    %477 = vector.broadcast %cst_54 : f32 to vector<8x256xf32>
    %478 = arith.mulf %477, %474 : vector<8x256xf32>
    %479 = arith.select %476, %474, %478 : vector<8x256xi1>, vector<8x256xf32>
    %c0_55 = arith.constant 0 : index
    %c0_56 = arith.constant 0 : index
    %480 = vector.load %arg7[%c0_55, %c0_56] : memref<8x256xf32, #tpu.memory_space<vmem>>, vector<8x256xf32>
    tpu.vector_store %arg7[%c0_55, %c0_56], %479 {strides = array<i32>} : memref<8x256xf32, #tpu.memory_space<vmem>>, vector<8x256xf32>,
    return
  }
}

</mosaic_0001>

<llo_original>
// kernel: tpu_custom_call.1
$region0: #{tpu_custom_call.1}
  #allocation0 [shape = 'u32[]', space=smem, size = 0x4, offset = 0x4, fixed_abs, tag = 'smem constant byte address 0x4 - core index']
  #allocation1 [shape = 'u32[144,128]{1,0:T(1,128)}', space=vmem, size = 0x12000, scoped, tag = 'internal scratch']
  %s0 = inlined_call_operand.vmem [shape: f32[8,256], index: 0, kind: input, shape index: {}]
  %s1 = inlined_call_operand.vmem [shape: f32[8,36], index: 1, kind: input, shape index: {}]
  %s2 = inlined_call_operand.vmem [shape: f32[8,36], index: 2, kind: input, shape index: {}]
  %s3 = inlined_call_operand.vmem [shape: f32[8,1], index: 3, kind: input, shape index: {}]
  %s4 = inlined_call_operand.vmem [shape: f32[8,1], index: 4, kind: input, shape index: {}]
  %s5 = inlined_call_operand.vmem [shape: f32[8,1], index: 5, kind: input, shape index: {}]
  %s6 = inlined_call_operand.vmem [shape: f32[8,1], index: 6, kind: input, shape index: {}]
  %s7 = inlined_call_operand.hbm [shape: f32[8,256], index: 7, kind: output, shape index: {}]
  %s8 = sld [smem:[#allocation0]]
  $region38: #{tpu_custom_call.1} parent=0
    _
  %s10 = ssub.s32 1, %s8
  %s11 = scalar_select 0, %s10, %s8
  $region1: #{tpu_custom_call.1} parent=0
    #allocation2 [shape = 'u8[8192]{0}', space=vmem, size = 0x2000, scoped, tag = 'output window, operand 0, single buffered']
    #allocation3 [shape = 's32[1]{0}', space=sflag, size = 0x4, scoped, tag = 'scoped memory for tpu_custom_call.1']
    %12 = vsyncpa [#allocation3], 0
    // Predicated region
    $region2: #{tpu_custom_call.1} parent=1 // pred_check
      _
    $region3: #{tpu_custom_call.1} parent=1 // pred_check_branch
      %14 = sbr.rel (0) target = $region5
    $region4: #{tpu_custom_call.1} parent=1 // pred_region
      _
    $region5: #{tpu_custom_call.1} parent=1 // pred_fallthru
      _
    // Predicated region
    $region6: #{tpu_custom_call.1} parent=1 // pred_check
      _
    $region7: #{tpu_custom_call.1} parent=1 // pred_check_branch
      %16 = sbr.rel (0) target = $region9
    $region8: #{tpu_custom_call.1} parent=1 // pred_region
      _
    $region9: #{tpu_custom_call.1} parent=1 // pred_fallthru
      _
    // Predicated region
    $region10: #{tpu_custom_call.1} parent=1 // pred_check
      _
    $region11: #{tpu_custom_call.1} parent=1 // pred_check_branch
      %18 = sbr.rel (0) target = $region13
    $region12: #{tpu_custom_call.1} parent=1 // pred_region
      _
    $region13: #{tpu_custom_call.1} parent=1 // pred_fallthru
      _
    // Predicated region
    $region14: #{tpu_custom_call.1} parent=1 // pred_check
      _
    $region15: #{tpu_custom_call.1} parent=1 // pred_check_branch
      %20 = sbr.rel (0) target = $region17
    $region16: #{tpu_custom_call.1} parent=1 // pred_region
      _
    $region17: #{tpu_custom_call.1} parent=1 // pred_fallthru
      _
    // Predicated region
    $region18: #{tpu_custom_call.1} parent=1 // pred_check
      _
    $region19: #{tpu_custom_call.1} parent=1 // pred_check_branch
      %22 = sbr.rel (0) target = $region21
    $region20: #{tpu_custom_call.1} parent=1 // pred_region
      _
    $region21: #{tpu_custom_call.1} parent=1 // pred_fallthru
      _
    // Predicated region
    $region22: #{tpu_custom_call.1} parent=1 // pred_check
      _
    $region23: #{tpu_custom_call.1} parent=1 // pred_check_branch
      %24 = sbr.rel (0) target = $region25
    $region24: #{tpu_custom_call.1} parent=1 // pred_region
      _
    $region25: #{tpu_custom_call.1} parent=1 // pred_fallthru
      _
    // Predicated region
    $region26: #{tpu_custom_call.1} parent=1 // pred_check
      _
    $region27: #{tpu_custom_call.1} parent=1 // pred_check_branch
      %26 = sbr.rel (0) target = $region29
    $region28: #{tpu_custom_call.1} parent=1 // pred_region
      _
    $region29: #{tpu_custom_call.1} parent=1 // pred_fallthru
      _
    %v27 = vld [vmem:[%s0] sm:$0xff]
    %v28 = vld [vmem:[%s0 + $0x8] sm:$0xff]
    %v29 = vlaneseq
    %v30 = vand.u32 %v29, 127
    %v31 = vadd.s32 %v30, 128
    %vm32 = vcmp.lt.s32.totalorder %v30, 0
    %v33 = vsub.s32 0, %v30
    %v34 = vsel %vm32, %v33, %v30
    %v35 = vshrl.u32 %v34, 4
    %v36 = vand.u32 %v34, 15
    %v37 = vsub.s32 0, %v36
    %v38 = vsel %vm32, %v37, %v36
    %vm39 = vcmp.lt.s32.totalorder %v31, 0
    %v40 = vsub.s32 0, %v31
    %v41 = vsel %vm39, %v40, %v31
    %v42 = vshrl.u32 %v41, 4
    %v43 = vand.u32 %v41, 15
    %v44 = vsub.s32 0, %v43
    %v45 = vsel %vm39, %v44, %v43
    %vm46 = vcmp.ne.s32.totalorder %v38, 0
    %vm47 = vcmp.ne.s32.totalorder %v45, 0
    %vm48 = vcmp.lt.s32.totalorder %v38, 0
    %vm49 = vcmp.lt.s32.totalorder %v45, 0
    %vm50 = vmand %vm48, %vm46
    %vm51 = vmand %vm49, %vm47
    %v52 = vadd.s32 %v38, 16
    %v53 = vadd.s32 %v45, 16
    %v54 = vsel %vm50, %v52, %v38
    %v55 = vsel %vm51, %v53, %v45
    %vm56 = vcmp.ge.s32.totalorder %v54, 1
    %vm57 = vcmp.ge.s32.totalorder %v55, 1
    %v58 = vsel %vm56, 1, 0
    %v59 = vsel %vm57, 1, 0
    %v60 = vcvt.s32.f32 %v58
    %v61 = vcvt.s32.f32 %v59
    %vm62 = vcmp.le.s32.totalorder %v54, 14
    %vm63 = vcmp.le.s32.totalorder %v55, 14
    %v64 = vsel %vm62, 1, 0
    %v65 = vsel %vm63, 1, 0
    %v66 = vcvt.s32.f32 %v64
    %v67 = vcvt.s32.f32 %v65
    %v68 = vld [vmem:[%s1] sm:$0xff]
    %71 = vrot.lane.b32.xlu0 %v60, 111
    %v72 = vpop.permute.xlu0 %71
    %73 = vrot.lane.b32.xlu0 %v61, 111
    %v74 = vpop.permute.xlu0 %73
    %vm75 = vcmask 908288
    %v76 = vsel %vm75, %v72, %v74
    %v80 = vmul.f32 %v72, 0.0
    %v81 = vmul.f32 %v27, %v76
    %v82 = vmul.f32 %v28, %v74
    %84 = vset.pattern.permute.xlu0 0
    %85 = vperm.xlu0 %84, %v68
    %v86 = vpop.permute.xlu0 %85
    %v88 = vmul.f32 %v86, %v80
    %v89 = vmul.f32 %v86, %v81
    %v90 = vmul.f32 %v86, %v82
    %v91 = vadd.f32 %v88, 0.0
    %v92 = vadd.f32 %v89, 0.0
    %v93 = vadd.f32 %v90, 0.0
    %94 = vset.pattern.permute.xlu0 1
    %95 = vperm.xlu0 %94, %v68
    %v96 = vpop.permute.xlu0 %95
    %v98 = vmul.f32 %v96, %v80
    %v99 = vmul.f32 %v96, %v81
    %v100 = vmul.f32 %v96, %v82
    %v101 = vadd.f32 %v98, 0.0
    %v102 = vadd.f32 %v99, 0.0
    %v103 = vadd.f32 %v100, 0.0
    %104 = vset.pattern.permute.xlu0 2
    %105 = vperm.xlu0 %104, %v68
    %v106 = vpop.permute.xlu0 %105
    %v108 = vmul.f32 %v106, %v80
    %v109 = vmul.f32 %v106, %v81
    %v110 = vmul.f32 %v106, %v82
    %v111 = vadd.f32 %v108, 0.0
    %v112 = vadd.f32 %v109, 0.0
    %v113 = vadd.f32 %v110, 0.0
    %114 = vset.pattern.permute.xlu0 3
    %115 = vperm.xlu0 %114, %v68
    %v116 = vpop.permute.xlu0 %115
    %v118 = vmul.f32 %v116, %v80
    %v119 = vmul.f32 %v116, %v81
    %v120 = vmul.f32 %v116, %v82
    %v121 = vadd.f32 %v118, 0.0
    %v122 = vadd.f32 %v119, 0.0
    %v123 = vadd.f32 %v120, 0.0
    %124 = vset.pattern.permute.xlu0 4
    %125 = vperm.xlu0 %124, %v68
    %v126 = vpop.permute.xlu0 %125
    %v128 = vmul.f32 %v126, 0.0
    %v129 = vmul.f32 %v126, %v27
    %v130 = vmul.f32 %v126, %v28
    %134 = vrot.lane.b32.xlu0 %v128, 127
    %v135 = vpop.permute.xlu0 %134
    %136 = vrot.lane.b32.xlu0 %v129, 127
    %v137 = vpop.permute.xlu0 %136
    %138 = vrot.lane.b32.xlu0 %v130, 127
    %v139 = vpop.permute.xlu0 %138
    %vm140 = vcmask 1039360
    %v141 = vsel %vm140, %v135, %v137
    %v142 = vsel %vm140, %v137, %v139
    %v146 = vadd.f32 %v91, %v141
    %v147 = vadd.f32 %v92, %v142
    %v148 = vadd.f32 %v93, %v139
    %149 = vset.pattern.permute.xlu0 5
    %150 = vperm.xlu0 %149, %v68
    %v151 = vpop.permute.xlu0 %150
    %v153 = vmul.f32 %v151, 0.0
    %v154 = vmul.f32 %v151, %v27
    %v155 = vmul.f32 %v151, %v28
    %159 = vrot.lane.b32.xlu0 %v153, 127
    %v160 = vpop.permute.xlu0 %159
    %161 = vrot.lane.b32.xlu0 %v154, 127
    %v162 = vpop.permute.xlu0 %161
    %163 = vrot.lane.b32.xlu0 %v155, 127
    %v164 = vpop.permute.xlu0 %163
    %v165 = vsel %vm140, %v160, %v162
    %v166 = vsel %vm140, %v162, %v164
    %v170 = vadd.f32 %v101, %v165
    %v171 = vadd.f32 %v102, %v166
    %v172 = vadd.f32 %v103, %v164
    %173 = vset.pattern.permute.xlu0 6
    %174 = vperm.xlu0 %173, %v68
    %v175 = vpop.permute.xlu0 %174
    %v177 = vmul.f32 %v175, 0.0
    %v178 = vmul.f32 %v175, %v27
    %v179 = vmul.f32 %v175, %v28
    %183 = vrot.lane.b32.xlu0 %v177, 127
    %v184 = vpop.permute.xlu0 %183
    %185 = vrot.lane.b32.xlu0 %v178, 127
    %v186 = vpop.permute.xlu0 %185
    %187 = vrot.lane.b32.xlu0 %v179, 127
    %v188 = vpop.permute.xlu0 %187
    %v189 = vsel %vm140, %v184, %v186
    %v190 = vsel %vm140, %v186, %v188
    %v194 = vadd.f32 %v111, %v189
    %v195 = vadd.f32 %v112, %v190
    %v196 = vadd.f32 %v113, %v188
    %197 = vset.pattern.permute.xlu0 7
    %198 = vperm.xlu0 %197, %v68
    %v199 = vpop.permute.xlu0 %198
    %v201 = vmul.f32 %v199, 0.0
    %v202 = vmul.f32 %v199, %v27
    %v203 = vmul.f32 %v199, %v28
    %207 = vrot.lane.b32.xlu0 %v201, 127
    %v208 = vpop.permute.xlu0 %207
    %209 = vrot.lane.b32.xlu0 %v202, 127
    %v210 = vpop.permute.xlu0 %209
    %211 = vrot.lane.b32.xlu0 %v203, 127
    %v212 = vpop.permute.xlu0 %211
    %v213 = vsel %vm140, %v208, %v210
    %v214 = vsel %vm140, %v210, %v212
    %v218 = vadd.f32 %v121, %v213
    %v219 = vadd.f32 %v122, %v214
    %v220 = vadd.f32 %v123, %v212
    %223 = vrot.lane.b32.xlu0 %v66, 113
    %v224 = vpop.permute.xlu0 %223
    %225 = vrot.lane.b32.xlu0 %v67, 113
    %v226 = vpop.permute.xlu0 %225
    %vm227 = vcmask 924672
    %v228 = vsel %vm227, %v224, %v226
    %v232 = vmul.f32 %v224, 0.0
    %v233 = vmul.f32 %v27, %v228
    %v234 = vmul.f32 %v28, %v226
    %235 = vset.pattern.permute.xlu0 8
    %236 = vperm.xlu0 %235, %v68
    %v237 = vpop.permute.xlu0 %236
    %v239 = vmul.f32 %v237, %v232
    %v240 = vmul.f32 %v237, %v233
    %v241 = vmul.f32 %v237, %v234
    %245 = vrot.lane.b32.xlu0 %v239, 126
    %v246 = vpop.permute.xlu0 %245
    %247 = vrot.lane.b32.xlu0 %v240, 126
    %v248 = vpop.permute.xlu0 %247
    %249 = vrot.lane.b32.xlu0 %v241, 126
    %v250 = vpop.permute.xlu0 %249
    %vm251 = vcmask 1031168
    %v252 = vsel %vm251, %v246, %v248
    %v253 = vsel %vm251, %v248, %v250
    %v257 = vadd.f32 %v146, %v252
    %v258 = vadd.f32 %v147, %v253
    %v259 = vadd.f32 %v148, %v250
    %260 = vset.pattern.permute.xlu0 9
    %261 = vperm.xlu0 %260, %v68
    %v262 = vpop.permute.xlu0 %261
    %v264 = vmul.f32 %v262, %v232
    %v265 = vmul.f32 %v262, %v233
    %v266 = vmul.f32 %v262, %v234
    %270 = vrot.lane.b32.xlu0 %v264, 126
    %v271 = vpop.permute.xlu0 %270
    %272 = vrot.lane.b32.xlu0 %v265, 126
    %v273 = vpop.permute.xlu0 %272
    %274 = vrot.lane.b32.xlu0 %v266, 126
    %v275 = vpop.permute.xlu0 %274
    %v276 = vsel %vm251, %v271, %v273
    %v277 = vsel %vm251, %v273, %v275
    %v281 = vadd.f32 %v170, %v276
    %v282 = vadd.f32 %v171, %v277
    %v283 = vadd.f32 %v172, %v275
    %284 = vset.pattern.permute.xlu0 10
    %285 = vperm.xlu0 %284, %v68
    %v286 = vpop.permute.xlu0 %285
    %v288 = vmul.f32 %v286, %v232
    %v289 = vmul.f32 %v286, %v233
    %v290 = vmul.f32 %v286, %v234
    %294 = vrot.lane.b32.xlu0 %v288, 126
    %v295 = vpop.permute.xlu0 %294
    %296 = vrot.lane.b32.xlu0 %v289, 126
    %v297 = vpop.permute.xlu0 %296
    %298 = vrot.lane.b32.xlu0 %v290, 126
    %v299 = vpop.permute.xlu0 %298
    %v300 = vsel %vm251, %v295, %v297
    %v301 = vsel %vm251, %v297, %v299
    %v305 = vadd.f32 %v194, %v300
    %v306 = vadd.f32 %v195, %v301
    %v307 = vadd.f32 %v196, %v299
    %308 = vset.pattern.permute.xlu0 11
    %309 = vperm.xlu0 %308, %v68
    %v310 = vpop.permute.xlu0 %309
    %v312 = vmul.f32 %v310, %v232
    %v313 = vmul.f32 %v310, %v233
    %v314 = vmul.f32 %v310, %v234
    %318 = vrot.lane.b32.xlu0 %v312, 126
    %v319 = vpop.permute.xlu0 %318
    %320 = vrot.lane.b32.xlu0 %v313, 126
    %v321 = vpop.permute.xlu0 %320
    %322 = vrot.lane.b32.xlu0 %v314, 126
    %v323 = vpop.permute.xlu0 %322
    %v324 = vsel %vm251, %v319, %v321
    %v325 = vsel %vm251, %v321, %v323
    %v329 = vadd.f32 %v218, %v324
    %v330 = vadd.f32 %v219, %v325
    %v331 = vadd.f32 %v220, %v323
    %332 = vrot.lane.b32.xlu0 %v60, 127
    %v333 = vpop.permute.xlu0 %332
    %334 = vrot.lane.b32.xlu0 %v61, 127
    %v335 = vpop.permute.xlu0 %334
    %v336 = vsel %vm140, %v333, %v335
    %v340 = vmul.f32 %v333, 0.0
    %v341 = vmul.f32 %v27, %v336
    %v342 = vmul.f32 %v28, %v335
    %343 = vset.pattern.permute.xlu0 12
    %344 = vperm.xlu0 %343, %v68
    %v345 = vpop.permute.xlu0 %344
    %v347 = vmul.f32 %v345, %v340
    %v348 = vmul.f32 %v345, %v341
    %v349 = vmul.f32 %v345, %v342
    %353 = vrot.lane.b32.xlu0 %v347, 112
    %v354 = vpop.permute.xlu0 %353
    %355 = vrot.lane.b32.xlu0 %v348, 112
    %v356 = vpop.permute.xlu0 %355
    %357 = vrot.lane.b32.xlu0 %v349, 112
    %v358 = vpop.permute.xlu0 %357
    %vm359 = vcmask 916480
    %v360 = vsel %vm359, %v354, %v356
    %v361 = vsel %vm359, %v356, %v358
    %v365 = vadd.f32 %v257, %v360
    %v366 = vadd.f32 %v258, %v361
    %v367 = vadd.f32 %v259, %v358
    %368 = vset.pattern.permute.xlu0 13
    %369 = vperm.xlu0 %368, %v68
    %v370 = vpop.permute.xlu0 %369
    %v372 = vmul.f32 %v370, %v340
    %v373 = vmul.f32 %v370, %v341
    %v374 = vmul.f32 %v370, %v342
    %378 = vrot.lane.b32.xlu0 %v372, 112
    %v379 = vpop.permute.xlu0 %378
    %380 = vrot.lane.b32.xlu0 %v373, 112
    %v381 = vpop.permute.xlu0 %380
    %382 = vrot.lane.b32.xlu0 %v374, 112
    %v383 = vpop.permute.xlu0 %382
    %v384 = vsel %vm359, %v379, %v381
    %v385 = vsel %vm359, %v381, %v383
    %v389 = vadd.f32 %v281, %v384
    %v390 = vadd.f32 %v282, %v385
    %v391 = vadd.f32 %v283, %v383
    %392 = vset.pattern.permute.xlu0 14
    %393 = vperm.xlu0 %392, %v68
    %v394 = vpop.permute.xlu0 %393
    %v396 = vmul.f32 %v394, %v340
    %v397 = vmul.f32 %v394, %v341
    %v398 = vmul.f32 %v394, %v342
    %402 = vrot.lane.b32.xlu0 %v396, 112
    %v403 = vpop.permute.xlu0 %402
    %404 = vrot.lane.b32.xlu0 %v397, 112
    %v405 = vpop.permute.xlu0 %404
    %406 = vrot.lane.b32.xlu0 %v398, 112
    %v407 = vpop.permute.xlu0 %406
    %v408 = vsel %vm359, %v403, %v405
    %v409 = vsel %vm359, %v405, %v407
    %v413 = vadd.f32 %v305, %v408
    %v414 = vadd.f32 %v306, %v409
    %v415 = vadd.f32 %v307, %v407
    %416 = vset.pattern.permute.xlu0 15
    %417 = vperm.xlu0 %416, %v68
    %v418 = vpop.permute.xlu0 %417
    %v420 = vmul.f32 %v418, %v340
    %v421 = vmul.f32 %v418, %v341
    %v422 = vmul.f32 %v418, %v342
    %426 = vrot.lane.b32.xlu0 %v420, 112
    %v427 = vpop.permute.xlu0 %426
    %428 = vrot.lane.b32.xlu0 %v421, 112
    %v429 = vpop.permute.xlu0 %428
    %430 = vrot.lane.b32.xlu0 %v422, 112
    %v431 = vpop.permute.xlu0 %430
    %v432 = vsel %vm359, %v427, %v429
    %v433 = vsel %vm359, %v429, %v431
    %v437 = vadd.f32 %v329, %v432
    %v438 = vadd.f32 %v330, %v433
    %v439 = vadd.f32 %v331, %v431
    %440 = vset.pattern.permute.xlu0 16
    %441 = vperm.xlu0 %440, %v68
    %v442 = vpop.permute.xlu0 %441
    %v444 = vmul.f32 %v442, %v27
    %v445 = vmul.f32 %v442, %v28
    %448 = vrot.lane.b32.xlu0 %v444, 111
    %v449 = vpop.permute.xlu0 %448
    %450 = vrot.lane.b32.xlu0 %v445, 111
    %v451 = vpop.permute.xlu0 %450
    %v452 = vsel %vm75, %v449, %v451
    %v456 = vadd.f32 %v365, %v449
    %v457 = vadd.f32 %v366, %v452
    %v458 = vadd.f32 %v367, %v451
    %459 = vset.pattern.permute.xlu0 17
    %460 = vperm.xlu0 %459, %v68
    %v461 = vpop.permute.xlu0 %460
    %v463 = vmul.f32 %v461, %v27
    %v464 = vmul.f32 %v461, %v28
    %467 = vrot.lane.b32.xlu0 %v463, 111
    %v468 = vpop.permute.xlu0 %467
    %469 = vrot.lane.b32.xlu0 %v464, 111
    %v470 = vpop.permute.xlu0 %469
    %v471 = vsel %vm75, %v468, %v470
    %v475 = vadd.f32 %v389, %v468
    %v476 = vadd.f32 %v390, %v471
    %v477 = vadd.f32 %v391, %v470
    %478 = vset.pattern.permute.xlu0 18
    %479 = vperm.xlu0 %478, %v68
    %v480 = vpop.permute.xlu0 %479
    %v482 = vmul.f32 %v480, %v27
    %v483 = vmul.f32 %v480, %v28
    %486 = vrot.lane.b32.xlu0 %v482, 111
    %v487 = vpop.permute.xlu0 %486
    %488 = vrot.lane.b32.xlu0 %v483, 111
    %v489 = vpop.permute.xlu0 %488
    %v490 = vsel %vm75, %v487, %v489
    %v494 = vadd.f32 %v413, %v487
    %v495 = vadd.f32 %v414, %v490
    %v496 = vadd.f32 %v415, %v489
    %497 = vset.pattern.permute.xlu0 19
    %498 = vperm.xlu0 %497, %v68
    %v499 = vpop.permute.xlu0 %498
    %v501 = vmul.f32 %v499, %v27
    %v502 = vmul.f32 %v499, %v28
    %505 = vrot.lane.b32.xlu0 %v501, 111
    %v506 = vpop.permute.xlu0 %505
    %507 = vrot.lane.b32.xlu0 %v502, 111
    %v508 = vpop.permute.xlu0 %507
    %v509 = vsel %vm75, %v506, %v508
    %v513 = vadd.f32 %v437, %v506
    %v514 = vadd.f32 %v438, %v509
    %v515 = vadd.f32 %v439, %v508
    %516 = vrot.lane.b32.xlu0 %v66, 1
    %v517 = vpop.permute.xlu0 %516
    %518 = vrot.lane.b32.xlu0 %v67, 1
    %v519 = vpop.permute.xlu0 %518
    %vm520 = vcmask 7168
    %v521 = vsel %vm520, %v517, %v519
    %v525 = vmul.f32 %v27, %v517
    %v526 = vmul.f32 %v28, %v521
    %v527 = vmul.f32 %v519, 0.0
    %528 = vset.pattern.permute.xlu0 20
    %529 = vperm.xlu0 %528, %v68
    %v530 = vpop.permute.xlu0 %529
    %v532 = vmul.f32 %v530, %v525
    %v533 = vmul.f32 %v530, %v526
    %v534 = vmul.f32 %v530, %v527
    %538 = vrot.lane.b32.xlu0 %v532, 110
    %v539 = vpop.permute.xlu0 %538
    %540 = vrot.lane.b32.xlu0 %v533, 110
    %v541 = vpop.permute.xlu0 %540
    %542 = vrot.lane.b32.xlu0 %v534, 110
    %v543 = vpop.permute.xlu0 %542
    %vm544 = vcmask 900096
    %v545 = vsel %vm544, %v539, %v541
    %v546 = vsel %vm544, %v541, %v543
    %v550 = vadd.f32 %v456, %v539
    %v551 = vadd.f32 %v457, %v545
    %v552 = vadd.f32 %v458, %v546
    %553 = vset.pattern.permute.xlu0 21
    %554 = vperm.xlu0 %553, %v68
    %v555 = vpop.permute.xlu0 %554
    %v557 = vmul.f32 %v555, %v525
    %v558 = vmul.f32 %v555, %v526
    %v559 = vmul.f32 %v555, %v527
    %563 = vrot.lane.b32.xlu0 %v557, 110
    %v564 = vpop.permute.xlu0 %563
    %565 = vrot.lane.b32.xlu0 %v558, 110
    %v566 = vpop.permute.xlu0 %565
    %567 = vrot.lane.b32.xlu0 %v559, 110
    %v568 = vpop.permute.xlu0 %567
    %v569 = vsel %vm544, %v564, %v566
    %v570 = vsel %vm544, %v566, %v568
    %v574 = vadd.f32 %v475, %v564
    %v575 = vadd.f32 %v476, %v569
    %v576 = vadd.f32 %v477, %v570
    %577 = vset.pattern.permute.xlu0 22
    %578 = vperm.xlu0 %577, %v68
    %v579 = vpop.permute.xlu0 %578
    %v581 = vmul.f32 %v579, %v525
    %v582 = vmul.f32 %v579, %v526
    %v583 = vmul.f32 %v579, %v527
    %587 = vrot.lane.b32.xlu0 %v581, 110
    %v588 = vpop.permute.xlu0 %587
    %589 = vrot.lane.b32.xlu0 %v582, 110
    %v590 = vpop.permute.xlu0 %589
    %591 = vrot.lane.b32.xlu0 %v583, 110
    %v592 = vpop.permute.xlu0 %591
    %v593 = vsel %vm544, %v588, %v590
    %v594 = vsel %vm544, %v590, %v592
    %v598 = vadd.f32 %v494, %v588
    %v599 = vadd.f32 %v495, %v593
    %v600 = vadd.f32 %v496, %v594
    %601 = vset.pattern.permute.xlu0 23
    %602 = vperm.xlu0 %601, %v68
    %v603 = vpop.permute.xlu0 %602
    %v605 = vmul.f32 %v603, %v525
    %v606 = vmul.f32 %v603, %v526
    %v607 = vmul.f32 %v603, %v527
    %611 = vrot.lane.b32.xlu0 %v605, 110
    %v612 = vpop.permute.xlu0 %611
    %613 = vrot.lane.b32.xlu0 %v606, 110
    %v614 = vpop.permute.xlu0 %613
    %615 = vrot.lane.b32.xlu0 %v607, 110
    %v616 = vpop.permute.xlu0 %615
    %v617 = vsel %vm544, %v612, %v614
    %v618 = vsel %vm544, %v614, %v616
    %v622 = vadd.f32 %v513, %v612
    %v623 = vadd.f32 %v514, %v617
    %v624 = vadd.f32 %v515, %v618
    %625 = vrot.lane.b32.xlu0 %v60, 15
    %v626 = vpop.permute.xlu0 %625
    %627 = vrot.lane.b32.xlu0 %v61, 15
    %v628 = vpop.permute.xlu0 %627
    %vm629 = vcmask 121856
    %v630 = vsel %vm629, %v626, %v628
    %v634 = vmul.f32 %v27, %v626
    %v635 = vmul.f32 %v28, %v630
    %v636 = vmul.f32 %v628, 0.0
    %637 = vset.pattern.permute.xlu0 24
    %638 = vperm.xlu0 %637, %v68
    %v639 = vpop.permute.xlu0 %638
    %v641 = vmul.f32 %v639, %v634
    %v642 = vmul.f32 %v639, %v635
    %v643 = vmul.f32 %v639, %v636
    %647 = vrot.lane.b32.xlu0 %v641, 96
    %v648 = vpop.permute.xlu0 %647
    %649 = vrot.lane.b32.xlu0 %v642, 96
    %v650 = vpop.permute.xlu0 %649
    %651 = vrot.lane.b32.xlu0 %v643, 96
    %v652 = vpop.permute.xlu0 %651
    %vm653 = vcmask 785408
    %v654 = vsel %vm653, %v648, %v650
    %v655 = vsel %vm653, %v650, %v652
    %v659 = vadd.f32 %v550, %v648
    %v660 = vadd.f32 %v551, %v654
    %v661 = vadd.f32 %v552, %v655
    %662 = vset.pattern.permute.xlu0 25
    %663 = vperm.xlu0 %662, %v68
    %v664 = vpop.permute.xlu0 %663
    %v666 = vmul.f32 %v664, %v634
    %v667 = vmul.f32 %v664, %v635
    %v668 = vmul.f32 %v664, %v636
    %672 = vrot.lane.b32.xlu0 %v666, 96
    %v673 = vpop.permute.xlu0 %672
    %674 = vrot.lane.b32.xlu0 %v667, 96
    %v675 = vpop.permute.xlu0 %674
    %676 = vrot.lane.b32.xlu0 %v668, 96
    %v677 = vpop.permute.xlu0 %676
    %v678 = vsel %vm653, %v673, %v675
    %v679 = vsel %vm653, %v675, %v677
    %v683 = vadd.f32 %v574, %v673
    %v684 = vadd.f32 %v575, %v678
    %v685 = vadd.f32 %v576, %v679
    %686 = vset.pattern.permute.xlu0 26
    %687 = vperm.xlu0 %686, %v68
    %v688 = vpop.permute.xlu0 %687
    %v690 = vmul.f32 %v688, %v634
    %v691 = vmul.f32 %v688, %v635
    %v692 = vmul.f32 %v688, %v636
    %696 = vrot.lane.b32.xlu0 %v690, 96
    %v697 = vpop.permute.xlu0 %696
    %698 = vrot.lane.b32.xlu0 %v691, 96
    %v699 = vpop.permute.xlu0 %698
    %700 = vrot.lane.b32.xlu0 %v692, 96
    %v701 = vpop.permute.xlu0 %700
    %v702 = vsel %vm653, %v697, %v699
    %v703 = vsel %vm653, %v699, %v701
    %v707 = vadd.f32 %v598, %v697
    %v708 = vadd.f32 %v599, %v702
    %v709 = vadd.f32 %v600, %v703
    %710 = vset.pattern.permute.xlu0 27
    %711 = vperm.xlu0 %710, %v68
    %v712 = vpop.permute.xlu0 %711
    %v714 = vmul.f32 %v712, %v634
    %v715 = vmul.f32 %v712, %v635
    %v716 = vmul.f32 %v712, %v636
    %720 = vrot.lane.b32.xlu0 %v714, 96
    %v721 = vpop.permute.xlu0 %720
    %722 = vrot.lane.b32.xlu0 %v715, 96
    %v723 = vpop.permute.xlu0 %722
    %724 = vrot.lane.b32.xlu0 %v716, 96
    %v725 = vpop.permute.xlu0 %724
    %v726 = vsel %vm653, %v721, %v723
    %v727 = vsel %vm653, %v723, %v725
    %v731 = vadd.f32 %v622, %v721
    %v732 = vadd.f32 %v623, %v726
    %v733 = vadd.f32 %v624, %v727
    %734 = vset.pattern.permute.xlu0 28
    %735 = vperm.xlu0 %734, %v68
    %v736 = vpop.permute.xlu0 %735
    %v738 = vmul.f32 %v736, %v27
    %v739 = vmul.f32 %v736, %v28
    %v740 = vmul.f32 %v736, 0.0
    %744 = vrot.lane.b32.xlu0 %v738, 95
    %v745 = vpop.permute.xlu0 %744
    %746 = vrot.lane.b32.xlu0 %v739, 95
    %v747 = vpop.permute.xlu0 %746
    %748 = vrot.lane.b32.xlu0 %v740, 95
    %v749 = vpop.permute.xlu0 %748
    %vm750 = vcmask 777216
    %v751 = vsel %vm750, %v745, %v747
    %v752 = vsel %vm750, %v747, %v749
    %v756 = vadd.f32 %v659, %v745
    %v757 = vadd.f32 %v660, %v751
    %v758 = vadd.f32 %v661, %v752
    %759 = vset.pattern.permute.xlu0 29
    %760 = vperm.xlu0 %759, %v68
    %v761 = vpop.permute.xlu0 %760
    %v763 = vmul.f32 %v761, %v27
    %v764 = vmul.f32 %v761, %v28
    %v765 = vmul.f32 %v761, 0.0
    %769 = vrot.lane.b32.xlu0 %v763, 95
    %v770 = vpop.permute.xlu0 %769
    %771 = vrot.lane.b32.xlu0 %v764, 95
    %v772 = vpop.permute.xlu0 %771
    %773 = vrot.lane.b32.xlu0 %v765, 95
    %v774 = vpop.permute.xlu0 %773
    %v775 = vsel %vm750, %v770, %v772
    %v776 = vsel %vm750, %v772, %v774
    %v780 = vadd.f32 %v683, %v770
    %v781 = vadd.f32 %v684, %v775
    %v782 = vadd.f32 %v685, %v776
    %783 = vset.pattern.permute.xlu0 30
    %784 = vperm.xlu0 %783, %v68
    %v785 = vpop.permute.xlu0 %784
    %v787 = vmul.f32 %v785, %v27
    %v788 = vmul.f32 %v785, %v28
    %v789 = vmul.f32 %v785, 0.0
    %793 = vrot.lane.b32.xlu0 %v787, 95
    %v794 = vpop.permute.xlu0 %793
    %795 = vrot.lane.b32.xlu0 %v788, 95
    %v796 = vpop.permute.xlu0 %795
    %797 = vrot.lane.b32.xlu0 %v789, 95
    %v798 = vpop.permute.xlu0 %797
    %v799 = vsel %vm750, %v794, %v796
    %v800 = vsel %vm750, %v796, %v798
    %v804 = vadd.f32 %v707, %v794
    %v805 = vadd.f32 %v708, %v799
    %v806 = vadd.f32 %v709, %v800
    %807 = vset.pattern.permute.xlu0 31
    %808 = vperm.xlu0 %807, %v68
    %v809 = vpop.permute.xlu0 %808
    %v811 = vmul.f32 %v809, %v27
    %v812 = vmul.f32 %v809, %v28
    %v813 = vmul.f32 %v809, 0.0
    %817 = vrot.lane.b32.xlu0 %v811, 95
    %v818 = vpop.permute.xlu0 %817
    %819 = vrot.lane.b32.xlu0 %v812, 95
    %v820 = vpop.permute.xlu0 %819
    %821 = vrot.lane.b32.xlu0 %v813, 95
    %v822 = vpop.permute.xlu0 %821
    %v823 = vsel %vm750, %v818, %v820
    %v824 = vsel %vm750, %v820, %v822
    %v828 = vadd.f32 %v731, %v818
    %v829 = vadd.f32 %v732, %v823
    %v830 = vadd.f32 %v733, %v824
    %831 = vrot.lane.b32.xlu0 %v66, 17
    %v832 = vpop.permute.xlu0 %831
    %833 = vrot.lane.b32.xlu0 %v67, 17
    %v834 = vpop.permute.xlu0 %833
    %vm835 = vcmask 138240
    %v836 = vsel %vm835, %v832, %v834
    %v840 = vmul.f32 %v27, %v832
    %v841 = vmul.f32 %v28, %v836
    %v842 = vmul.f32 %v834, 0.0
    %843 = vset.pattern.permute.xlu0 32
    %844 = vperm.xlu0 %843, %v68
    %v845 = vpop.permute.xlu0 %844
    %v847 = vmul.f32 %v845, %v840
    %v848 = vmul.f32 %v845, %v841
    %v849 = vmul.f32 %v845, %v842
    %853 = vrot.lane.b32.xlu0 %v847, 94
    %v854 = vpop.permute.xlu0 %853
    %855 = vrot.lane.b32.xlu0 %v848, 94
    %v856 = vpop.permute.xlu0 %855
    %857 = vrot.lane.b32.xlu0 %v849, 94
    %v858 = vpop.permute.xlu0 %857
    %vm859 = vcmask 769024
    %v860 = vsel %vm859, %v854, %v856
    %v861 = vsel %vm859, %v856, %v858
    %v865 = vadd.f32 %v756, %v854
    %v866 = vadd.f32 %v757, %v860
    %v867 = vadd.f32 %v758, %v861
    %868 = vset.pattern.permute.xlu0 33
    %869 = vperm.xlu0 %868, %v68
    %v870 = vpop.permute.xlu0 %869
    %v872 = vmul.f32 %v870, %v840
    %v873 = vmul.f32 %v870, %v841
    %v874 = vmul.f32 %v870, %v842
    %878 = vrot.lane.b32.xlu0 %v872, 94
    %v879 = vpop.permute.xlu0 %878
    %880 = vrot.lane.b32.xlu0 %v873, 94
    %v881 = vpop.permute.xlu0 %880
    %882 = vrot.lane.b32.xlu0 %v874, 94
    %v883 = vpop.permute.xlu0 %882
    %v884 = vsel %vm859, %v879, %v881
    %v885 = vsel %vm859, %v881, %v883
    %v889 = vadd.f32 %v780, %v879
    %v890 = vadd.f32 %v781, %v884
    %v891 = vadd.f32 %v782, %v885
    %892 = vset.pattern.permute.xlu0 34
    %893 = vperm.xlu0 %892, %v68
    %v894 = vpop.permute.xlu0 %893
    %v896 = vmul.f32 %v894, %v840
    %v897 = vmul.f32 %v894, %v841
    %v898 = vmul.f32 %v894, %v842
    %902 = vrot.lane.b32.xlu0 %v896, 94
    %v903 = vpop.permute.xlu0 %902
    %904 = vrot.lane.b32.xlu0 %v897, 94
    %v905 = vpop.permute.xlu0 %904
    %906 = vrot.lane.b32.xlu0 %v898, 94
    %v907 = vpop.permute.xlu0 %906
    %v908 = vsel %vm859, %v903, %v905
    %v909 = vsel %vm859, %v905, %v907
    %v913 = vadd.f32 %v804, %v903
    %v914 = vadd.f32 %v805, %v908
    %v915 = vadd.f32 %v806, %v909
    %916 = vset.pattern.permute.xlu0 35
    %917 = vperm.xlu0 %916, %v68
    %v918 = vpop.permute.xlu0 %917
    %v920 = vmul.f32 %v918, %v840
    %v921 = vmul.f32 %v918, %v841
    %v922 = vmul.f32 %v918, %v842
    %926 = vrot.lane.b32.xlu0 %v920, 94
    %v927 = vpop.permute.xlu0 %926
    %928 = vrot.lane.b32.xlu0 %v921, 94
    %v929 = vpop.permute.xlu0 %928
    %930 = vrot.lane.b32.xlu0 %v922, 94
    %v931 = vpop.permute.xlu0 %930
    %v932 = vsel %vm859, %v927, %v929
    %v933 = vsel %vm859, %v929, %v931
    %v937 = vadd.f32 %v828, %v927
    %v938 = vadd.f32 %v829, %v932
    %v939 = vadd.f32 %v830, %v933
    %vm940 = vcmask 1044344
    %v941 = vsel %vm940, %v865, 0.0
    %v942 = vrot.slane %v941, 4
    %v943 = vadd.f32 %v941, %v942
    %v944 = vrot.slane %v943, 2
    %v945 = vadd.f32 %v943, %v944
    %v946 = vrot.slane %v945, 1
    %v947 = vadd.f32 %v945, %v946
    %vm948 = vcmask 1043456
    %v949 = vsel %vm948, %v866, 0.0
    %v950 = vrot.slane %v949, 4
    %v951 = vadd.f32 %v949, %v950
    %v952 = vrot.slane %v951, 2
    %v953 = vadd.f32 %v951, %v952
    %v954 = vrot.slane %v953, 1
    %v955 = vadd.f32 %v953, %v954
    %vm956 = vcmask 904192
    %v957 = vsel %vm956, %v867, 0.0
    %v958 = vrot.slane %v957, 4
    %v959 = vadd.f32 %v957, %v958
    %v960 = vrot.slane %v959, 2
    %v961 = vadd.f32 %v959, %v960
    %v962 = vrot.slane %v961, 1
    %v963 = vadd.f32 %v961, %v962
    %v964 = vsel %vm940, %v889, 0.0
    %v965 = vrot.slane %v964, 4
    %v966 = vadd.f32 %v964, %v965
    %v967 = vrot.slane %v966, 2
    %v968 = vadd.f32 %v966, %v967
    %v969 = vrot.slane %v968, 1
    %v970 = vadd.f32 %v968, %v969
    %v971 = vsel %vm948, %v890, 0.0
    %v972 = vrot.slane %v971, 4
    %v973 = vadd.f32 %v971, %v972
    %v974 = vrot.slane %v973, 2
    %v975 = vadd.f32 %v973, %v974
    %v976 = vrot.slane %v975, 1
    %v977 = vadd.f32 %v975, %v976
    %v978 = vsel %vm956, %v891, 0.0
    %v979 = vrot.slane %v978, 4
    %v980 = vadd.f32 %v978, %v979
    %v981 = vrot.slane %v980, 2
    %v982 = vadd.f32 %v980, %v981
    %v983 = vrot.slane %v982, 1
    %v984 = vadd.f32 %v982, %v983
    %v985 = vsel %vm940, %v913, 0.0
    %v986 = vrot.slane %v985, 4
    %v987 = vadd.f32 %v985, %v986
    %v988 = vrot.slane %v987, 2
    %v989 = vadd.f32 %v987, %v988
    %v990 = vrot.slane %v989, 1
    %v991 = vadd.f32 %v989, %v990
    %v992 = vsel %vm948, %v914, 0.0
    %v993 = vrot.slane %v992, 4
    %v994 = vadd.f32 %v992, %v993
    %v995 = vrot.slane %v994, 2
    %v996 = vadd.f32 %v994, %v995
    %v997 = vrot.slane %v996, 1
    %v998 = vadd.f32 %v996, %v997
    %v999 = vsel %vm956, %v915, 0.0
    %v1000 = vrot.slane %v999, 4
    %v1001 = vadd.f32 %v999, %v1000
    %v1002 = vrot.slane %v1001, 2
    %v1003 = vadd.f32 %v1001, %v1002
    %v1004 = vrot.slane %v1003, 1
    %v1005 = vadd.f32 %v1003, %v1004
    %v1006 = vsel %vm940, %v937, 0.0
    %v1007 = vrot.slane %v1006, 4
    %v1008 = vadd.f32 %v1006, %v1007
    %v1009 = vrot.slane %v1008, 2
    %v1010 = vadd.f32 %v1008, %v1009
    %v1011 = vrot.slane %v1010, 1
    %v1012 = vadd.f32 %v1010, %v1011
    %v1013 = vsel %vm948, %v938, 0.0
    %v1014 = vrot.slane %v1013, 4
    %v1015 = vadd.f32 %v1013, %v1014
    %v1016 = vrot.slane %v1015, 2
    %v1017 = vadd.f32 %v1015, %v1016
    %v1018 = vrot.slane %v1017, 1
    %v1019 = vadd.f32 %v1017, %v1018
    %v1020 = vsel %vm956, %v939, 0.0
    %v1021 = vrot.slane %v1020, 4
    %v1022 = vadd.f32 %v1020, %v1021
    %v1023 = vrot.slane %v1022, 2
    %v1024 = vadd.f32 %v1022, %v1023
    %v1025 = vrot.slane %v1024, 1
    %v1026 = vadd.f32 %v1024, %v1025
    %v1030 = vrot.slane %v865, 4
    %v1031 = vrot.slane %v866, 4
    %v1032 = vrot.slane %v867, 4
    %v1036 = vsel %vm940, %v1030, 0.0
    %v1037 = vrot.slane %v1036, 4
    %v1038 = vadd.f32 %v1036, %v1037
    %v1039 = vrot.slane %v1038, 2
    %v1040 = vadd.f32 %v1038, %v1039
    %v1041 = vrot.slane %v1040, 1
    %v1042 = vadd.f32 %v1040, %v1041
    %v1043 = vsel %vm948, %v1031, 0.0
    %v1044 = vrot.slane %v1043, 4
    %v1045 = vadd.f32 %v1043, %v1044
    %v1046 = vrot.slane %v1045, 2
    %v1047 = vadd.f32 %v1045, %v1046
    %v1048 = vrot.slane %v1047, 1
    %v1049 = vadd.f32 %v1047, %v1048
    %v1050 = vsel %vm956, %v1032, 0.0
    %v1051 = vrot.slane %v1050, 4
    %v1052 = vadd.f32 %v1050, %v1051
    %v1053 = vrot.slane %v1052, 2
    %v1054 = vadd.f32 %v1052, %v1053
    %v1055 = vrot.slane %v1054, 1
    %v1056 = vadd.f32 %v1054, %v1055
    %v1060 = vrot.slane %v889, 4
    %v1061 = vrot.slane %v890, 4
    %v1062 = vrot.slane %v891, 4
    %v1066 = vsel %vm940, %v1060, 0.0
    %v1067 = vrot.slane %v1066, 4
    %v1068 = vadd.f32 %v1066, %v1067
    %v1069 = vrot.slane %v1068, 2
    %v1070 = vadd.f32 %v1068, %v1069
    %v1071 = vrot.slane %v1070, 1
    %v1072 = vadd.f32 %v1070, %v1071
    %v1073 = vsel %vm948, %v1061, 0.0
    %v1074 = vrot.slane %v1073, 4
    %v1075 = vadd.f32 %v1073, %v1074
    %v1076 = vrot.slane %v1075, 2
    %v1077 = vadd.f32 %v1075, %v1076
    %v1078 = vrot.slane %v1077, 1
    %v1079 = vadd.f32 %v1077, %v1078
    %v1080 = vsel %vm956, %v1062, 0.0
    %v1081 = vrot.slane %v1080, 4
    %v1082 = vadd.f32 %v1080, %v1081
    %v1083 = vrot.slane %v1082, 2
    %v1084 = vadd.f32 %v1082, %v1083
    %v1085 = vrot.slane %v1084, 1
    %v1086 = vadd.f32 %v1084, %v1085
    %v1090 = vrot.slane %v913, 4
    %v1091 = vrot.slane %v914, 4
    %v1092 = vrot.slane %v915, 4
    %v1096 = vsel %vm940, %v1090, 0.0
    %v1097 = vrot.slane %v1096, 4
    %v1098 = vadd.f32 %v1096, %v1097
    %v1099 = vrot.slane %v1098, 2
    %v1100 = vadd.f32 %v1098, %v1099
    %v1101 = vrot.slane %v1100, 1
    %v1102 = vadd.f32 %v1100, %v1101
    %v1103 = vsel %vm948, %v1091, 0.0
    %v1104 = vrot.slane %v1103, 4
    %v1105 = vadd.f32 %v1103, %v1104
    %v1106 = vrot.slane %v1105, 2
    %v1107 = vadd.f32 %v1105, %v1106
    %v1108 = vrot.slane %v1107, 1
    %v1109 = vadd.f32 %v1107, %v1108
    %v1110 = vsel %vm956, %v1092, 0.0
    %v1111 = vrot.slane %v1110, 4
    %v1112 = vadd.f32 %v1110, %v1111
    %v1113 = vrot.slane %v1112, 2
    %v1114 = vadd.f32 %v1112, %v1113
    %v1115 = vrot.slane %v1114, 1
    %v1116 = vadd.f32 %v1114, %v1115
    %v1120 = vrot.slane %v937, 4
    %v1121 = vrot.slane %v938, 4
    %v1122 = vrot.slane %v939, 4
    %v1126 = vsel %vm940, %v1120, 0.0
    %v1127 = vrot.slane %v1126, 4
    %v1128 = vadd.f32 %v1126, %v1127
    %v1129 = vrot.slane %v1128, 2
    %v1130 = vadd.f32 %v1128, %v1129
    %v1131 = vrot.slane %v1130, 1
    %v1132 = vadd.f32 %v1130, %v1131
    %v1133 = vsel %vm948, %v1121, 0.0
    %v1134 = vrot.slane %v1133, 4
    %v1135 = vadd.f32 %v1133, %v1134
    %v1136 = vrot.slane %v1135, 2
    %v1137 = vadd.f32 %v1135, %v1136
    %v1138 = vrot.slane %v1137, 1
    %v1139 = vadd.f32 %v1137, %v1138
    %v1140 = vsel %vm956, %v1122, 0.0
    %v1141 = vrot.slane %v1140, 4
    %v1142 = vadd.f32 %v1140, %v1141
    %v1143 = vrot.slane %v1142, 2
    %v1144 = vadd.f32 %v1142, %v1143
    %v1145 = vrot.slane %v1144, 1
    %v1146 = vadd.f32 %v1144, %v1145
    %vm1147 = vcmask 1040384
    %v1148 = vsel %vm1147, %v947, %v970
    %v1149 = vsel %vm1147, %v955, %v977
    %v1150 = vsel %vm1147, %v963, %v984
    %vm1151 = vcmask 1041408
    %v1152 = vsel %vm1151, %v1148, %v991
    %v1153 = vsel %vm1151, %v1149, %v998
    %v1154 = vsel %vm1151, %v1150, %v1005
    %vm1155 = vcmask 1042432
    %v1156 = vsel %vm1155, %v1152, %v1012
    %v1157 = vsel %vm1155, %v1153, %v1019
    %v1158 = vsel %vm1155, %v1154, %v1026
    %v1159 = vsel %vm948, %v1156, %v1042
    %v1160 = vsel %vm948, %v1157, %v1049
    %v1161 = vsel %vm948, %v1158, %v1056
    %vm1162 = vcmask 1044480
    %v1163 = vsel %vm1162, %v1159, %v1072
    %v1164 = vsel %vm1162, %v1160, %v1079
    %v1165 = vsel %vm1162, %v1161, %v1086
    %vm1166 = vcmask 1045504
    %v1167 = vsel %vm1166, %v1163, %v1102
    %v1168 = vsel %vm1166, %v1164, %v1109
    %v1169 = vsel %vm1166, %v1165, %v1116
    %vm1170 = vcmask 1046528
    %v1171 = vsel %vm1170, %v1167, %v1132
    %v1172 = vsel %vm1170, %v1168, %v1139
    %v1173 = vsel %vm1170, %v1169, %v1146
    %v1174 = vld [vmem:[%s3] sm:$0xff]
    %v1175 = vld [vmem:[%s4] sm:$0xff]
    %1179 = vrot.lane.b32.xlu0 %v1171, 17
    %v1180 = vpop.permute.xlu0 %1179
    %1181 = vrot.lane.b32.xlu0 %v1172, 17
    %v1182 = vpop.permute.xlu0 %1181
    %1183 = vrot.lane.b32.xlu0 %v1173, 17
    %v1184 = vpop.permute.xlu0 %1183
    %v1185 = vsel %vm835, %v1180, %v1182
    %v1186 = vsel %vm835, %v1182, %v1184
    %v1189 = vadd.f32 %v1185, %v1186
    %1190 = vadd.xlane.f32.xlu0 %v1189
    %v1191 = vpop.xlane.xlu0 %1190
    %v1193 = vrot.slane %v1191, 4
    %v1195 = vadd.f32 %v1191, %v1193
    %v1197 = vrot.slane %v1195, 4
    %v1199 = vsel %vm948, %v1195, %v1197
    %v1200 = vmul.f32 %v1199, 0.001953125
    %1202 = vset.pattern.permute.xlu0 0
    %1203 = vperm.xlu0 %1202, %v1200
    %v1204 = vpop.permute.xlu0 %1203
    %v1206 = vsub.f32 %v1171, %v1204
    %v1207 = vsub.f32 %v1172, %v1204
    %v1208 = vsub.f32 %v1173, %v1204
    %v1209 = vmul.f32 %v1206, %v1206
    %v1210 = vmul.f32 %v1207, %v1207
    %v1211 = vmul.f32 %v1208, %v1208
    %1215 = vrot.lane.b32.xlu0 %v1209, 17
    %v1216 = vpop.permute.xlu0 %1215
    %1217 = vrot.lane.b32.xlu0 %v1210, 17
    %v1218 = vpop.permute.xlu0 %1217
    %1219 = vrot.lane.b32.xlu0 %v1211, 17
    %v1220 = vpop.permute.xlu0 %1219
    %v1221 = vsel %vm835, %v1216, %v1218
    %v1222 = vsel %vm835, %v1218, %v1220
    %v1225 = vadd.f32 %v1221, %v1222
    %1226 = vadd.xlane.f32.xlu0 %v1225
    %v1227 = vpop.xlane.xlu0 %1226
    %v1229 = vrot.slane %v1227, 4
    %v1231 = vadd.f32 %v1227, %v1229
    %v1233 = vrot.slane %v1231, 4
    %v1235 = vsel %vm948, %v1231, %v1233
    %v1236 = vmul.f32 %v1235, 0.001953125
    %v1237 = vadd.f32 %v1236, 1e-05
    %v1238 = vrsqrt.pop %v1237
    %v1239 = vmul.f32 %v1238, %v1174
    %1241 = vset.pattern.permute.xlu0 0
    %1242 = vperm.xlu0 %1241, %v1239
    %v1243 = vpop.permute.xlu0 %1242
    %v1245 = vmul.f32 %v1206, %v1243
    %v1246 = vmul.f32 %v1207, %v1243
    %v1247 = vmul.f32 %v1208, %v1243
    %1249 = vset.pattern.permute.xlu0 0
    %1250 = vperm.xlu0 %1249, %v1175
    %v1251 = vpop.permute.xlu0 %1250
    %v1253 = vadd.f32 %v1245, %v1251
    %v1254 = vadd.f32 %v1246, %v1251
    %v1255 = vadd.f32 %v1247, %v1251
    %vm1256 = vcmp.ge.f32.partialorder %v1253, 0.0
    %vm1257 = vcmp.ge.f32.partialorder %v1254, 0.0
    %vm1258 = vcmp.ge.f32.partialorder %v1255, 0.0
    %v1259 = vmul.f32 %v1253, 0.01
    %v1260 = vmul.f32 %v1254, 0.01
    %v1261 = vmul.f32 %v1255, 0.01
    %v1262 = vsel %vm1256, %v1253, %v1259
    %v1263 = vsel %vm1257, %v1254, %v1260
    %v1264 = vsel %vm1258, %v1255, %v1261
    %v1265 = vld [vmem:[%s2] sm:$0xff]
    %1269 = vrot.lane.b32.xlu0 %v1262, 17
    %v1270 = vpop.permute.xlu0 %1269
    %1271 = vrot.lane.b32.xlu0 %v1263, 17
    %v1272 = vpop.permute.xlu0 %1271
    %1273 = vrot.lane.b32.xlu0 %v1264, 17
    %v1274 = vpop.permute.xlu0 %1273
    %v1275 = vsel %vm835, %v1270, %v1272
    %v1276 = vsel %vm835, %v1272, %v1274
    %v1279 = vmul.f32 %v1275, %v76
    %v1280 = vmul.f32 %v1276, %v74
    %1282 = vset.pattern.permute.xlu0 0
    %1283 = vperm.xlu0 %1282, %v1265
    %v1284 = vpop.permute.xlu0 %1283
    %v1286 = vmul.f32 %v1284, %v80
    %v1287 = vmul.f32 %v1284, %v1279
    %v1288 = vmul.f32 %v1284, %v1280
    %v1289 = vadd.f32 %v1286, 0.0
    %v1290 = vadd.f32 %v1287, 0.0
    %v1291 = vadd.f32 %v1288, 0.0
    %1292 = vset.pattern.permute.xlu0 1
    %1293 = vperm.xlu0 %1292, %v1265
    %v1294 = vpop.permute.xlu0 %1293
    %v1296 = vmul.f32 %v1294, %v80
    %v1297 = vmul.f32 %v1294, %v1279
    %v1298 = vmul.f32 %v1294, %v1280
    %v1299 = vadd.f32 %v1296, 0.0
    %v1300 = vadd.f32 %v1297, 0.0
    %v1301 = vadd.f32 %v1298, 0.0
    %1302 = vset.pattern.permute.xlu0 2
    %1303 = vperm.xlu0 %1302, %v1265
    %v1304 = vpop.permute.xlu0 %1303
    %v1306 = vmul.f32 %v1304, %v80
    %v1307 = vmul.f32 %v1304, %v1279
    %v1308 = vmul.f32 %v1304, %v1280
    %v1309 = vadd.f32 %v1306, 0.0
    %v1310 = vadd.f32 %v1307, 0.0
    %v1311 = vadd.f32 %v1308, 0.0
    %1312 = vset.pattern.permute.xlu0 3
    %1313 = vperm.xlu0 %1312, %v1265
    %v1314 = vpop.permute.xlu0 %1313
    %v1316 = vmul.f32 %v1314, %v80
    %v1317 = vmul.f32 %v1314, %v1279
    %v1318 = vmul.f32 %v1314, %v1280
    %v1319 = vadd.f32 %v1316, 0.0
    %v1320 = vadd.f32 %v1317, 0.0
    %v1321 = vadd.f32 %v1318, 0.0
    %1322 = vset.pattern.permute.xlu0 4
    %1323 = vperm.xlu0 %1322, %v1265
    %v1324 = vpop.permute.xlu0 %1323
    %v1326 = vmul.f32 %v1324, 0.0
    %v1327 = vmul.f32 %v1324, %v1275
    %v1328 = vmul.f32 %v1324, %v1276
    %1332 = vrot.lane.b32.xlu0 %v1326, 127
    %v1333 = vpop.permute.xlu0 %1332
    %1334 = vrot.lane.b32.xlu0 %v1327, 127
    %v1335 = vpop.permute.xlu0 %1334
    %1336 = vrot.lane.b32.xlu0 %v1328, 127
    %v1337 = vpop.permute.xlu0 %1336
    %v1338 = vsel %vm140, %v1333, %v1335
    %v1339 = vsel %vm140, %v1335, %v1337
    %v1343 = vadd.f32 %v1289, %v1338
    %v1344 = vadd.f32 %v1290, %v1339
    %v1345 = vadd.f32 %v1291, %v1337
    %1346 = vset.pattern.permute.xlu0 5
    %1347 = vperm.xlu0 %1346, %v1265
    %v1348 = vpop.permute.xlu0 %1347
    %v1350 = vmul.f32 %v1348, 0.0
    %v1351 = vmul.f32 %v1348, %v1275
    %v1352 = vmul.f32 %v1348, %v1276
    %1356 = vrot.lane.b32.xlu0 %v1350, 127
    %v1357 = vpop.permute.xlu0 %1356
    %1358 = vrot.lane.b32.xlu0 %v1351, 127
    %v1359 = vpop.permute.xlu0 %1358
    %1360 = vrot.lane.b32.xlu0 %v1352, 127
    %v1361 = vpop.permute.xlu0 %1360
    %v1362 = vsel %vm140, %v1357, %v1359
    %v1363 = vsel %vm140, %v1359, %v1361
    %v1367 = vadd.f32 %v1299, %v1362
    %v1368 = vadd.f32 %v1300, %v1363
    %v1369 = vadd.f32 %v1301, %v1361
    %1370 = vset.pattern.permute.xlu0 6
    %1371 = vperm.xlu0 %1370, %v1265
    %v1372 = vpop.permute.xlu0 %1371
    %v1374 = vmul.f32 %v1372, 0.0
    %v1375 = vmul.f32 %v1372, %v1275
    %v1376 = vmul.f32 %v1372, %v1276
    %1380 = vrot.lane.b32.xlu0 %v1374, 127
    %v1381 = vpop.permute.xlu0 %1380
    %1382 = vrot.lane.b32.xlu0 %v1375, 127
    %v1383 = vpop.permute.xlu0 %1382
    %1384 = vrot.lane.b32.xlu0 %v1376, 127
    %v1385 = vpop.permute.xlu0 %1384
    %v1386 = vsel %vm140, %v1381, %v1383
    %v1387 = vsel %vm140, %v1383, %v1385
    %v1391 = vadd.f32 %v1309, %v1386
    %v1392 = vadd.f32 %v1310, %v1387
    %v1393 = vadd.f32 %v1311, %v1385
    %1394 = vset.pattern.permute.xlu0 7
    %1395 = vperm.xlu0 %1394, %v1265
    %v1396 = vpop.permute.xlu0 %1395
    %v1398 = vmul.f32 %v1396, 0.0
    %v1399 = vmul.f32 %v1396, %v1275
    %v1400 = vmul.f32 %v1396, %v1276
    %1404 = vrot.lane.b32.xlu0 %v1398, 127
    %v1405 = vpop.permute.xlu0 %1404
    %1406 = vrot.lane.b32.xlu0 %v1399, 127
    %v1407 = vpop.permute.xlu0 %1406
    %1408 = vrot.lane.b32.xlu0 %v1400, 127
    %v1409 = vpop.permute.xlu0 %1408
    %v1410 = vsel %vm140, %v1405, %v1407
    %v1411 = vsel %vm140, %v1407, %v1409
    %v1415 = vadd.f32 %v1319, %v1410
    %v1416 = vadd.f32 %v1320, %v1411
    %v1417 = vadd.f32 %v1321, %v1409
    %v1418 = vmul.f32 %v1275, %v228
    %v1419 = vmul.f32 %v1276, %v226
    %1420 = vset.pattern.permute.xlu0 8
    %1421 = vperm.xlu0 %1420, %v1265
    %v1422 = vpop.permute.xlu0 %1421
    %v1424 = vmul.f32 %v1422, %v232
    %v1425 = vmul.f32 %v1422, %v1418
    %v1426 = vmul.f32 %v1422, %v1419
    %1430 = vrot.lane.b32.xlu0 %v1424, 126
    %v1431 = vpop.permute.xlu0 %1430
    %1432 = vrot.lane.b32.xlu0 %v1425, 126
    %v1433 = vpop.permute.xlu0 %1432
    %1434 = vrot.lane.b32.xlu0 %v1426, 126
    %v1435 = vpop.permute.xlu0 %1434
    %v1436 = vsel %vm251, %v1431, %v1433
    %v1437 = vsel %vm251, %v1433, %v1435
    %v1441 = vadd.f32 %v1343, %v1436
    %v1442 = vadd.f32 %v1344, %v1437
    %v1443 = vadd.f32 %v1345, %v1435
    %1444 = vset.pattern.permute.xlu0 9
    %1445 = vperm.xlu0 %1444, %v1265
    %v1446 = vpop.permute.xlu0 %1445
    %v1448 = vmul.f32 %v1446, %v232
    %v1449 = vmul.f32 %v1446, %v1418
    %v1450 = vmul.f32 %v1446, %v1419
    %1454 = vrot.lane.b32.xlu0 %v1448, 126
    %v1455 = vpop.permute.xlu0 %1454
    %1456 = vrot.lane.b32.xlu0 %v1449, 126
    %v1457 = vpop.permute.xlu0 %1456
    %1458 = vrot.lane.b32.xlu0 %v1450, 126
    %v1459 = vpop.permute.xlu0 %1458
    %v1460 = vsel %vm251, %v1455, %v1457
    %v1461 = vsel %vm251, %v1457, %v1459
    %v1465 = vadd.f32 %v1367, %v1460
    %v1466 = vadd.f32 %v1368, %v1461
    %v1467 = vadd.f32 %v1369, %v1459
    %1468 = vset.pattern.permute.xlu0 10
    %1469 = vperm.xlu0 %1468, %v1265
    %v1470 = vpop.permute.xlu0 %1469
    %v1472 = vmul.f32 %v1470, %v232
    %v1473 = vmul.f32 %v1470, %v1418
    %v1474 = vmul.f32 %v1470, %v1419
    %1478 = vrot.lane.b32.xlu0 %v1472, 126
    %v1479 = vpop.permute.xlu0 %1478
    %1480 = vrot.lane.b32.xlu0 %v1473, 126
    %v1481 = vpop.permute.xlu0 %1480
    %1482 = vrot.lane.b32.xlu0 %v1474, 126
    %v1483 = vpop.permute.xlu0 %1482
    %v1484 = vsel %vm251, %v1479, %v1481
    %v1485 = vsel %vm251, %v1481, %v1483
    %v1489 = vadd.f32 %v1391, %v1484
    %v1490 = vadd.f32 %v1392, %v1485
    %v1491 = vadd.f32 %v1393, %v1483
    %1492 = vset.pattern.permute.xlu0 11
    %1493 = vperm.xlu0 %1492, %v1265
    %v1494 = vpop.permute.xlu0 %1493
    %v1496 = vmul.f32 %v1494, %v232
    %v1497 = vmul.f32 %v1494, %v1418
    %v1498 = vmul.f32 %v1494, %v1419
    %1502 = vrot.lane.b32.xlu0 %v1496, 126
    %v1503 = vpop.permute.xlu0 %1502
    %1504 = vrot.lane.b32.xlu0 %v1497, 126
    %v1505 = vpop.permute.xlu0 %1504
    %1506 = vrot.lane.b32.xlu0 %v1498, 126
    %v1507 = vpop.permute.xlu0 %1506
    %v1508 = vsel %vm251, %v1503, %v1505
    %v1509 = vsel %vm251, %v1505, %v1507
    %v1513 = vadd.f32 %v1415, %v1508
    %v1514 = vadd.f32 %v1416, %v1509
    %v1515 = vadd.f32 %v1417, %v1507
    %v1516 = vmul.f32 %v1275, %v336
    %v1517 = vmul.f32 %v1276, %v335
    %1518 = vset.pattern.permute.xlu0 12
    %1519 = vperm.xlu0 %1518, %v1265
    %v1520 = vpop.permute.xlu0 %1519
    %v1522 = vmul.f32 %v1520, %v340
    %v1523 = vmul.f32 %v1520, %v1516
    %v1524 = vmul.f32 %v1520, %v1517
    %1528 = vrot.lane.b32.xlu0 %v1522, 112
    %v1529 = vpop.permute.xlu0 %1528
    %1530 = vrot.lane.b32.xlu0 %v1523, 112
    %v1531 = vpop.permute.xlu0 %1530
    %1532 = vrot.lane.b32.xlu0 %v1524, 112
    %v1533 = vpop.permute.xlu0 %1532
    %v1534 = vsel %vm359, %v1529, %v1531
    %v1535 = vsel %vm359, %v1531, %v1533
    %v1539 = vadd.f32 %v1441, %v1534
    %v1540 = vadd.f32 %v1442, %v1535
    %v1541 = vadd.f32 %v1443, %v1533
    %1542 = vset.pattern.permute.xlu0 13
    %1543 = vperm.xlu0 %1542, %v1265
    %v1544 = vpop.permute.xlu0 %1543
    %v1546 = vmul.f32 %v1544, %v340
    %v1547 = vmul.f32 %v1544, %v1516
    %v1548 = vmul.f32 %v1544, %v1517
    %1552 = vrot.lane.b32.xlu0 %v1546, 112
    %v1553 = vpop.permute.xlu0 %1552
    %1554 = vrot.lane.b32.xlu0 %v1547, 112
    %v1555 = vpop.permute.xlu0 %1554
    %1556 = vrot.lane.b32.xlu0 %v1548, 112
    %v1557 = vpop.permute.xlu0 %1556
    %v1558 = vsel %vm359, %v1553, %v1555
    %v1559 = vsel %vm359, %v1555, %v1557
    %v1563 = vadd.f32 %v1465, %v1558
    %v1564 = vadd.f32 %v1466, %v1559
    %v1565 = vadd.f32 %v1467, %v1557
    %1566 = vset.pattern.permute.xlu0 14
    %1567 = vperm.xlu0 %1566, %v1265
    %v1568 = vpop.permute.xlu0 %1567
    %v1570 = vmul.f32 %v1568, %v340
    %v1571 = vmul.f32 %v1568, %v1516
    %v1572 = vmul.f32 %v1568, %v1517
    %1576 = vrot.lane.b32.xlu0 %v1570, 112
    %v1577 = vpop.permute.xlu0 %1576
    %1578 = vrot.lane.b32.xlu0 %v1571, 112
    %v1579 = vpop.permute.xlu0 %1578
    %1580 = vrot.lane.b32.xlu0 %v1572, 112
    %v1581 = vpop.permute.xlu0 %1580
    %v1582 = vsel %vm359, %v1577, %v1579
    %v1583 = vsel %vm359, %v1579, %v1581
    %v1587 = vadd.f32 %v1489, %v1582
    %v1588 = vadd.f32 %v1490, %v1583
    %v1589 = vadd.f32 %v1491, %v1581
    %1590 = vset.pattern.permute.xlu0 15
    %1591 = vperm.xlu0 %1590, %v1265
    %v1592 = vpop.permute.xlu0 %1591
    %v1594 = vmul.f32 %v1592, %v340
    %v1595 = vmul.f32 %v1592, %v1516
    %v1596 = vmul.f32 %v1592, %v1517
    %1600 = vrot.lane.b32.xlu0 %v1594, 112
    %v1601 = vpop.permute.xlu0 %1600
    %1602 = vrot.lane.b32.xlu0 %v1595, 112
    %v1603 = vpop.permute.xlu0 %1602
    %1604 = vrot.lane.b32.xlu0 %v1596, 112
    %v1605 = vpop.permute.xlu0 %1604
    %v1606 = vsel %vm359, %v1601, %v1603
    %v1607 = vsel %vm359, %v1603, %v1605
    %v1611 = vadd.f32 %v1513, %v1606
    %v1612 = vadd.f32 %v1514, %v1607
    %v1613 = vadd.f32 %v1515, %v1605
    %1614 = vset.pattern.permute.xlu0 16
    %1615 = vperm.xlu0 %1614, %v1265
    %v1616 = vpop.permute.xlu0 %1615
    %v1618 = vmul.f32 %v1616, %v1275
    %v1619 = vmul.f32 %v1616, %v1276
    %1622 = vrot.lane.b32.xlu0 %v1618, 111
    %v1623 = vpop.permute.xlu0 %1622
    %1624 = vrot.lane.b32.xlu0 %v1619, 111
    %v1625 = vpop.permute.xlu0 %1624
    %v1626 = vsel %vm75, %v1623, %v1625
    %v1630 = vadd.f32 %v1539, %v1623
    %v1631 = vadd.f32 %v1540, %v1626
    %v1632 = vadd.f32 %v1541, %v1625
    %1633 = vset.pattern.permute.xlu0 17
    %1634 = vperm.xlu0 %1633, %v1265
    %v1635 = vpop.permute.xlu0 %1634
    %v1637 = vmul.f32 %v1635, %v1275
    %v1638 = vmul.f32 %v1635, %v1276
    %1641 = vrot.lane.b32.xlu0 %v1637, 111
    %v1642 = vpop.permute.xlu0 %1641
    %1643 = vrot.lane.b32.xlu0 %v1638, 111
    %v1644 = vpop.permute.xlu0 %1643
    %v1645 = vsel %vm75, %v1642, %v1644
    %v1649 = vadd.f32 %v1563, %v1642
    %v1650 = vadd.f32 %v1564, %v1645
    %v1651 = vadd.f32 %v1565, %v1644
    %1652 = vset.pattern.permute.xlu0 18
    %1653 = vperm.xlu0 %1652, %v1265
    %v1654 = vpop.permute.xlu0 %1653
    %v1656 = vmul.f32 %v1654, %v1275
    %v1657 = vmul.f32 %v1654, %v1276
    %1660 = vrot.lane.b32.xlu0 %v1656, 111
    %v1661 = vpop.permute.xlu0 %1660
    %1662 = vrot.lane.b32.xlu0 %v1657, 111
    %v1663 = vpop.permute.xlu0 %1662
    %v1664 = vsel %vm75, %v1661, %v1663
    %v1668 = vadd.f32 %v1587, %v1661
    %v1669 = vadd.f32 %v1588, %v1664
    %v1670 = vadd.f32 %v1589, %v1663
    %1671 = vset.pattern.permute.xlu0 19
    %1672 = vperm.xlu0 %1671, %v1265
    %v1673 = vpop.permute.xlu0 %1672
    %v1675 = vmul.f32 %v1673, %v1275
    %v1676 = vmul.f32 %v1673, %v1276
    %1679 = vrot.lane.b32.xlu0 %v1675, 111
    %v1680 = vpop.permute.xlu0 %1679
    %1681 = vrot.lane.b32.xlu0 %v1676, 111
    %v1682 = vpop.permute.xlu0 %1681
    %v1683 = vsel %vm75, %v1680, %v1682
    %v1687 = vadd.f32 %v1611, %v1680
    %v1688 = vadd.f32 %v1612, %v1683
    %v1689 = vadd.f32 %v1613, %v1682
    %v1690 = vmul.f32 %v1275, %v517
    %v1691 = vmul.f32 %v1276, %v521
    %1692 = vset.pattern.permute.xlu0 20
    %1693 = vperm.xlu0 %1692, %v1265
    %v1694 = vpop.permute.xlu0 %1693
    %v1696 = vmul.f32 %v1694, %v1690
    %v1697 = vmul.f32 %v1694, %v1691
    %v1698 = vmul.f32 %v1694, %v527
    %1702 = vrot.lane.b32.xlu0 %v1696, 110
    %v1703 = vpop.permute.xlu0 %1702
    %1704 = vrot.lane.b32.xlu0 %v1697, 110
    %v1705 = vpop.permute.xlu0 %1704
    %1706 = vrot.lane.b32.xlu0 %v1698, 110
    %v1707 = vpop.permute.xlu0 %1706
    %v1708 = vsel %vm544, %v1703, %v1705
    %v1709 = vsel %vm544, %v1705, %v1707
    %v1713 = vadd.f32 %v1630, %v1703
    %v1714 = vadd.f32 %v1631, %v1708
    %v1715 = vadd.f32 %v1632, %v1709
    %1716 = vset.pattern.permute.xlu0 21
    %1717 = vperm.xlu0 %1716, %v1265
    %v1718 = vpop.permute.xlu0 %1717
    %v1720 = vmul.f32 %v1718, %v1690
    %v1721 = vmul.f32 %v1718, %v1691
    %v1722 = vmul.f32 %v1718, %v527
    %1726 = vrot.lane.b32.xlu0 %v1720, 110
    %v1727 = vpop.permute.xlu0 %1726
    %1728 = vrot.lane.b32.xlu0 %v1721, 110
    %v1729 = vpop.permute.xlu0 %1728
    %1730 = vrot.lane.b32.xlu0 %v1722, 110
    %v1731 = vpop.permute.xlu0 %1730
    %v1732 = vsel %vm544, %v1727, %v1729
    %v1733 = vsel %vm544, %v1729, %v1731
    %v1737 = vadd.f32 %v1649, %v1727
    %v1738 = vadd.f32 %v1650, %v1732
    %v1739 = vadd.f32 %v1651, %v1733
    %1740 = vset.pattern.permute.xlu0 22
    %1741 = vperm.xlu0 %1740, %v1265
    %v1742 = vpop.permute.xlu0 %1741
    %v1744 = vmul.f32 %v1742, %v1690
    %v1745 = vmul.f32 %v1742, %v1691
    %v1746 = vmul.f32 %v1742, %v527
    %1750 = vrot.lane.b32.xlu0 %v1744, 110
    %v1751 = vpop.permute.xlu0 %1750
    %1752 = vrot.lane.b32.xlu0 %v1745, 110
    %v1753 = vpop.permute.xlu0 %1752
    %1754 = vrot.lane.b32.xlu0 %v1746, 110
    %v1755 = vpop.permute.xlu0 %1754
    %v1756 = vsel %vm544, %v1751, %v1753
    %v1757 = vsel %vm544, %v1753, %v1755
    %v1761 = vadd.f32 %v1668, %v1751
    %v1762 = vadd.f32 %v1669, %v1756
    %v1763 = vadd.f32 %v1670, %v1757
    %1764 = vset.pattern.permute.xlu0 23
    %1765 = vperm.xlu0 %1764, %v1265
    %v1766 = vpop.permute.xlu0 %1765
    %v1768 = vmul.f32 %v1766, %v1690
    %v1769 = vmul.f32 %v1766, %v1691
    %v1770 = vmul.f32 %v1766, %v527
    %1774 = vrot.lane.b32.xlu0 %v1768, 110
    %v1775 = vpop.permute.xlu0 %1774
    %1776 = vrot.lane.b32.xlu0 %v1769, 110
    %v1777 = vpop.permute.xlu0 %1776
    %1778 = vrot.lane.b32.xlu0 %v1770, 110
    %v1779 = vpop.permute.xlu0 %1778
    %v1780 = vsel %vm544, %v1775, %v1777
    %v1781 = vsel %vm544, %v1777, %v1779
    %v1785 = vadd.f32 %v1687, %v1775
    %v1786 = vadd.f32 %v1688, %v1780
    %v1787 = vadd.f32 %v1689, %v1781
    %v1788 = vmul.f32 %v1275, %v626
    %v1789 = vmul.f32 %v1276, %v630
    %1790 = vset.pattern.permute.xlu0 24
    %1791 = vperm.xlu0 %1790, %v1265
    %v1792 = vpop.permute.xlu0 %1791
    %v1794 = vmul.f32 %v1792, %v1788
    %v1795 = vmul.f32 %v1792, %v1789
    %v1796 = vmul.f32 %v1792, %v636
    %1800 = vrot.lane.b32.xlu0 %v1794, 96
    %v1801 = vpop.permute.xlu0 %1800
    %1802 = vrot.lane.b32.xlu0 %v1795, 96
    %v1803 = vpop.permute.xlu0 %1802
    %1804 = vrot.lane.b32.xlu0 %v1796, 96
    %v1805 = vpop.permute.xlu0 %1804
    %v1806 = vsel %vm653, %v1801, %v1803
    %v1807 = vsel %vm653, %v1803, %v1805
    %v1811 = vadd.f32 %v1713, %v1801
    %v1812 = vadd.f32 %v1714, %v1806
    %v1813 = vadd.f32 %v1715, %v1807
    %1814 = vset.pattern.permute.xlu0 25
    %1815 = vperm.xlu0 %1814, %v1265
    %v1816 = vpop.permute.xlu0 %1815
    %v1818 = vmul.f32 %v1816, %v1788
    %v1819 = vmul.f32 %v1816, %v1789
    %v1820 = vmul.f32 %v1816, %v636
    %1824 = vrot.lane.b32.xlu0 %v1818, 96
    %v1825 = vpop.permute.xlu0 %1824
    %1826 = vrot.lane.b32.xlu0 %v1819, 96
    %v1827 = vpop.permute.xlu0 %1826
    %1828 = vrot.lane.b32.xlu0 %v1820, 96
    %v1829 = vpop.permute.xlu0 %1828
    %v1830 = vsel %vm653, %v1825, %v1827
    %v1831 = vsel %vm653, %v1827, %v1829
    %v1835 = vadd.f32 %v1737, %v1825
    %v1836 = vadd.f32 %v1738, %v1830
    %v1837 = vadd.f32 %v1739, %v1831
    %1838 = vset.pattern.permute.xlu0 26
    %1839 = vperm.xlu0 %1838, %v1265
    %v1840 = vpop.permute.xlu0 %1839
    %v1842 = vmul.f32 %v1840, %v1788
    %v1843 = vmul.f32 %v1840, %v1789
    %v1844 = vmul.f32 %v1840, %v636
    %1848 = vrot.lane.b32.xlu0 %v1842, 96
    %v1849 = vpop.permute.xlu0 %1848
    %1850 = vrot.lane.b32.xlu0 %v1843, 96
    %v1851 = vpop.permute.xlu0 %1850
    %1852 = vrot.lane.b32.xlu0 %v1844, 96
    %v1853 = vpop.permute.xlu0 %1852
    %v1854 = vsel %vm653, %v1849, %v1851
    %v1855 = vsel %vm653, %v1851, %v1853
    %v1859 = vadd.f32 %v1761, %v1849
    %v1860 = vadd.f32 %v1762, %v1854
    %v1861 = vadd.f32 %v1763, %v1855
    %1862 = vset.pattern.permute.xlu0 27
    %1863 = vperm.xlu0 %1862, %v1265
    %v1864 = vpop.permute.xlu0 %1863
    %v1866 = vmul.f32 %v1864, %v1788
    %v1867 = vmul.f32 %v1864, %v1789
    %v1868 = vmul.f32 %v1864, %v636
    %1872 = vrot.lane.b32.xlu0 %v1866, 96
    %v1873 = vpop.permute.xlu0 %1872
    %1874 = vrot.lane.b32.xlu0 %v1867, 96
    %v1875 = vpop.permute.xlu0 %1874
    %1876 = vrot.lane.b32.xlu0 %v1868, 96
    %v1877 = vpop.permute.xlu0 %1876
    %v1878 = vsel %vm653, %v1873, %v1875
    %v1879 = vsel %vm653, %v1875, %v1877
    %v1883 = vadd.f32 %v1785, %v1873
    %v1884 = vadd.f32 %v1786, %v1878
    %v1885 = vadd.f32 %v1787, %v1879
    %1886 = vset.pattern.permute.xlu0 28
    %1887 = vperm.xlu0 %1886, %v1265
    %v1888 = vpop.permute.xlu0 %1887
    %v1890 = vmul.f32 %v1888, %v1275
    %v1891 = vmul.f32 %v1888, %v1276
    %v1892 = vmul.f32 %v1888, 0.0
    %1896 = vrot.lane.b32.xlu0 %v1890, 95
    %v1897 = vpop.permute.xlu0 %1896
    %1898 = vrot.lane.b32.xlu0 %v1891, 95
    %v1899 = vpop.permute.xlu0 %1898
    %1900 = vrot.lane.b32.xlu0 %v1892, 95
    %v1901 = vpop.permute.xlu0 %1900
    %v1902 = vsel %vm750, %v1897, %v1899
    %v1903 = vsel %vm750, %v1899, %v1901
    %v1907 = vadd.f32 %v1811, %v1897
    %v1908 = vadd.f32 %v1812, %v1902
    %v1909 = vadd.f32 %v1813, %v1903
    %1910 = vset.pattern.permute.xlu0 29
    %1911 = vperm.xlu0 %1910, %v1265
    %v1912 = vpop.permute.xlu0 %1911
    %v1914 = vmul.f32 %v1912, %v1275
    %v1915 = vmul.f32 %v1912, %v1276
    %v1916 = vmul.f32 %v1912, 0.0
    %1920 = vrot.lane.b32.xlu0 %v1914, 95
    %v1921 = vpop.permute.xlu0 %1920
    %1922 = vrot.lane.b32.xlu0 %v1915, 95
    %v1923 = vpop.permute.xlu0 %1922
    %1924 = vrot.lane.b32.xlu0 %v1916, 95
    %v1925 = vpop.permute.xlu0 %1924
    %v1926 = vsel %vm750, %v1921, %v1923
    %v1927 = vsel %vm750, %v1923, %v1925
    %v1931 = vadd.f32 %v1835, %v1921
    %v1932 = vadd.f32 %v1836, %v1926
    %v1933 = vadd.f32 %v1837, %v1927
    %1934 = vset.pattern.permute.xlu0 30
    %1935 = vperm.xlu0 %1934, %v1265
    %v1936 = vpop.permute.xlu0 %1935
    %v1938 = vmul.f32 %v1936, %v1275
    %v1939 = vmul.f32 %v1936, %v1276
    %v1940 = vmul.f32 %v1936, 0.0
    %1944 = vrot.lane.b32.xlu0 %v1938, 95
    %v1945 = vpop.permute.xlu0 %1944
    %1946 = vrot.lane.b32.xlu0 %v1939, 95
    %v1947 = vpop.permute.xlu0 %1946
    %1948 = vrot.lane.b32.xlu0 %v1940, 95
    %v1949 = vpop.permute.xlu0 %1948
    %v1950 = vsel %vm750, %v1945, %v1947
    %v1951 = vsel %vm750, %v1947, %v1949
    %v1955 = vadd.f32 %v1859, %v1945
    %v1956 = vadd.f32 %v1860, %v1950
    %v1957 = vadd.f32 %v1861, %v1951
    %1958 = vset.pattern.permute.xlu0 31
    %1959 = vperm.xlu0 %1958, %v1265
    %v1960 = vpop.permute.xlu0 %1959
    %v1962 = vmul.f32 %v1960, %v1275
    %v1963 = vmul.f32 %v1960, %v1276
    %v1964 = vmul.f32 %v1960, 0.0
    %1968 = vrot.lane.b32.xlu0 %v1962, 95
    %v1969 = vpop.permute.xlu0 %1968
    %1970 = vrot.lane.b32.xlu0 %v1963, 95
    %v1971 = vpop.permute.xlu0 %1970
    %1972 = vrot.lane.b32.xlu0 %v1964, 95
    %v1973 = vpop.permute.xlu0 %1972
    %v1974 = vsel %vm750, %v1969, %v1971
    %v1975 = vsel %vm750, %v1971, %v1973
    %v1979 = vadd.f32 %v1883, %v1969
    %v1980 = vadd.f32 %v1884, %v1974
    %v1981 = vadd.f32 %v1885, %v1975
    %v1982 = vmul.f32 %v1275, %v832
    %v1983 = vmul.f32 %v1276, %v836
    %1984 = vset.pattern.permute.xlu0 32
    %1985 = vperm.xlu0 %1984, %v1265
    %v1986 = vpop.permute.xlu0 %1985
    %v1988 = vmul.f32 %v1986, %v1982
    %v1989 = vmul.f32 %v1986, %v1983
    %v1990 = vmul.f32 %v1986, %v842
    %1994 = vrot.lane.b32.xlu0 %v1988, 94
    %v1995 = vpop.permute.xlu0 %1994
    %1996 = vrot.lane.b32.xlu0 %v1989, 94
    %v1997 = vpop.permute.xlu0 %1996
    %1998 = vrot.lane.b32.xlu0 %v1990, 94
    %v1999 = vpop.permute.xlu0 %1998
    %v2000 = vsel %vm859, %v1995, %v1997
    %v2001 = vsel %vm859, %v1997, %v1999
    %v2005 = vadd.f32 %v1907, %v1995
    %v2006 = vadd.f32 %v1908, %v2000
    %v2007 = vadd.f32 %v1909, %v2001
    %2008 = vset.pattern.permute.xlu0 33
    %2009 = vperm.xlu0 %2008, %v1265
    %v2010 = vpop.permute.xlu0 %2009
    %v2012 = vmul.f32 %v2010, %v1982
    %v2013 = vmul.f32 %v2010, %v1983
    %v2014 = vmul.f32 %v2010, %v842
    %2018 = vrot.lane.b32.xlu0 %v2012, 94
    %v2019 = vpop.permute.xlu0 %2018
    %2020 = vrot.lane.b32.xlu0 %v2013, 94
    %v2021 = vpop.permute.xlu0 %2020
    %2022 = vrot.lane.b32.xlu0 %v2014, 94
    %v2023 = vpop.permute.xlu0 %2022
    %v2024 = vsel %vm859, %v2019, %v2021
    %v2025 = vsel %vm859, %v2021, %v2023
    %v2029 = vadd.f32 %v1931, %v2019
    %v2030 = vadd.f32 %v1932, %v2024
    %v2031 = vadd.f32 %v1933, %v2025
    %2032 = vset.pattern.permute.xlu0 34
    %2033 = vperm.xlu0 %2032, %v1265
    %v2034 = vpop.permute.xlu0 %2033
    %v2036 = vmul.f32 %v2034, %v1982
    %v2037 = vmul.f32 %v2034, %v1983
    %v2038 = vmul.f32 %v2034, %v842
    %2042 = vrot.lane.b32.xlu0 %v2036, 94
    %v2043 = vpop.permute.xlu0 %2042
    %2044 = vrot.lane.b32.xlu0 %v2037, 94
    %v2045 = vpop.permute.xlu0 %2044
    %2046 = vrot.lane.b32.xlu0 %v2038, 94
    %v2047 = vpop.permute.xlu0 %2046
    %v2048 = vsel %vm859, %v2043, %v2045
    %v2049 = vsel %vm859, %v2045, %v2047
    %v2053 = vadd.f32 %v1955, %v2043
    %v2054 = vadd.f32 %v1956, %v2048
    %v2055 = vadd.f32 %v1957, %v2049
    %2056 = vset.pattern.permute.xlu0 35
    %2057 = vperm.xlu0 %2056, %v1265
    %v2058 = vpop.permute.xlu0 %2057
    %v2060 = vmul.f32 %v2058, %v1982
    %v2061 = vmul.f32 %v2058, %v1983
    %v2062 = vmul.f32 %v2058, %v842
    %2066 = vrot.lane.b32.xlu0 %v2060, 94
    %v2067 = vpop.permute.xlu0 %2066
    %2068 = vrot.lane.b32.xlu0 %v2061, 94
    %v2069 = vpop.permute.xlu0 %2068
    %2070 = vrot.lane.b32.xlu0 %v2062, 94
    %v2071 = vpop.permute.xlu0 %2070
    %v2072 = vsel %vm859, %v2067, %v2069
    %v2073 = vsel %vm859, %v2069, %v2071
    %v2077 = vadd.f32 %v1979, %v2067
    %v2078 = vadd.f32 %v1980, %v2072
    %v2079 = vadd.f32 %v1981, %v2073
    %v2080 = vsel %vm940, %v2005, 0.0
    %v2081 = vrot.slane %v2080, 4
    %v2082 = vadd.f32 %v2080, %v2081
    %v2083 = vrot.slane %v2082, 2
    %v2084 = vadd.f32 %v2082, %v2083
    %v2085 = vrot.slane %v2084, 1
    %v2086 = vadd.f32 %v2084, %v2085
    %v2087 = vsel %vm948, %v2006, 0.0
    %v2088 = vrot.slane %v2087, 4
    %v2089 = vadd.f32 %v2087, %v2088
    %v2090 = vrot.slane %v2089, 2
    %v2091 = vadd.f32 %v2089, %v2090
    %v2092 = vrot.slane %v2091, 1
    %v2093 = vadd.f32 %v2091, %v2092
    %v2094 = vsel %vm956, %v2007, 0.0
    %v2095 = vrot.slane %v2094, 4
    %v2096 = vadd.f32 %v2094, %v2095
    %v2097 = vrot.slane %v2096, 2
    %v2098 = vadd.f32 %v2096, %v2097
    %v2099 = vrot.slane %v2098, 1
    %v2100 = vadd.f32 %v2098, %v2099
    %v2101 = vsel %vm940, %v2029, 0.0
    %v2102 = vrot.slane %v2101, 4
    %v2103 = vadd.f32 %v2101, %v2102
    %v2104 = vrot.slane %v2103, 2
    %v2105 = vadd.f32 %v2103, %v2104
    %v2106 = vrot.slane %v2105, 1
    %v2107 = vadd.f32 %v2105, %v2106
    %v2108 = vsel %vm948, %v2030, 0.0
    %v2109 = vrot.slane %v2108, 4
    %v2110 = vadd.f32 %v2108, %v2109
    %v2111 = vrot.slane %v2110, 2
    %v2112 = vadd.f32 %v2110, %v2111
    %v2113 = vrot.slane %v2112, 1
    %v2114 = vadd.f32 %v2112, %v2113
    %v2115 = vsel %vm956, %v2031, 0.0
    %v2116 = vrot.slane %v2115, 4
    %v2117 = vadd.f32 %v2115, %v2116
    %v2118 = vrot.slane %v2117, 2
    %v2119 = vadd.f32 %v2117, %v2118
    %v2120 = vrot.slane %v2119, 1
    %v2121 = vadd.f32 %v2119, %v2120
    %v2122 = vsel %vm940, %v2053, 0.0
    %v2123 = vrot.slane %v2122, 4
    %v2124 = vadd.f32 %v2122, %v2123
    %v2125 = vrot.slane %v2124, 2
    %v2126 = vadd.f32 %v2124, %v2125
    %v2127 = vrot.slane %v2126, 1
    %v2128 = vadd.f32 %v2126, %v2127
    %v2129 = vsel %vm948, %v2054, 0.0
    %v2130 = vrot.slane %v2129, 4
    %v2131 = vadd.f32 %v2129, %v2130
    %v2132 = vrot.slane %v2131, 2
    %v2133 = vadd.f32 %v2131, %v2132
    %v2134 = vrot.slane %v2133, 1
    %v2135 = vadd.f32 %v2133, %v2134
    %v2136 = vsel %vm956, %v2055, 0.0
    %v2137 = vrot.slane %v2136, 4
    %v2138 = vadd.f32 %v2136, %v2137
    %v2139 = vrot.slane %v2138, 2
    %v2140 = vadd.f32 %v2138, %v2139
    %v2141 = vrot.slane %v2140, 1
    %v2142 = vadd.f32 %v2140, %v2141
    %v2143 = vsel %vm940, %v2077, 0.0
    %v2144 = vrot.slane %v2143, 4
    %v2145 = vadd.f32 %v2143, %v2144
    %v2146 = vrot.slane %v2145, 2
    %v2147 = vadd.f32 %v2145, %v2146
    %v2148 = vrot.slane %v2147, 1
    %v2149 = vadd.f32 %v2147, %v2148
    %v2150 = vsel %vm948, %v2078, 0.0
    %v2151 = vrot.slane %v2150, 4
    %v2152 = vadd.f32 %v2150, %v2151
    %v2153 = vrot.slane %v2152, 2
    %v2154 = vadd.f32 %v2152, %v2153
    %v2155 = vrot.slane %v2154, 1
    %v2156 = vadd.f32 %v2154, %v2155
    %v2157 = vsel %vm956, %v2079, 0.0
    %v2158 = vrot.slane %v2157, 4
    %v2159 = vadd.f32 %v2157, %v2158
    %v2160 = vrot.slane %v2159, 2
    %v2161 = vadd.f32 %v2159, %v2160
    %v2162 = vrot.slane %v2161, 1
    %v2163 = vadd.f32 %v2161, %v2162
    %v2167 = vrot.slane %v2005, 4
    %v2168 = vrot.slane %v2006, 4
    %v2169 = vrot.slane %v2007, 4
    %v2173 = vsel %vm940, %v2167, 0.0
    %v2174 = vrot.slane %v2173, 4
    %v2175 = vadd.f32 %v2173, %v2174
    %v2176 = vrot.slane %v2175, 2
    %v2177 = vadd.f32 %v2175, %v2176
    %v2178 = vrot.slane %v2177, 1
    %v2179 = vadd.f32 %v2177, %v2178
    %v2180 = vsel %vm948, %v2168, 0.0
    %v2181 = vrot.slane %v2180, 4
    %v2182 = vadd.f32 %v2180, %v2181
    %v2183 = vrot.slane %v2182, 2
    %v2184 = vadd.f32 %v2182, %v2183
    %v2185 = vrot.slane %v2184, 1
    %v2186 = vadd.f32 %v2184, %v2185
    %v2187 = vsel %vm956, %v2169, 0.0
    %v2188 = vrot.slane %v2187, 4
    %v2189 = vadd.f32 %v2187, %v2188
    %v2190 = vrot.slane %v2189, 2
    %v2191 = vadd.f32 %v2189, %v2190
    %v2192 = vrot.slane %v2191, 1
    %v2193 = vadd.f32 %v2191, %v2192
    %v2197 = vrot.slane %v2029, 4
    %v2198 = vrot.slane %v2030, 4
    %v2199 = vrot.slane %v2031, 4
    %v2203 = vsel %vm940, %v2197, 0.0
    %v2204 = vrot.slane %v2203, 4
    %v2205 = vadd.f32 %v2203, %v2204
    %v2206 = vrot.slane %v2205, 2
    %v2207 = vadd.f32 %v2205, %v2206
    %v2208 = vrot.slane %v2207, 1
    %v2209 = vadd.f32 %v2207, %v2208
    %v2210 = vsel %vm948, %v2198, 0.0
    %v2211 = vrot.slane %v2210, 4
    %v2212 = vadd.f32 %v2210, %v2211
    %v2213 = vrot.slane %v2212, 2
    %v2214 = vadd.f32 %v2212, %v2213
    %v2215 = vrot.slane %v2214, 1
    %v2216 = vadd.f32 %v2214, %v2215
    %v2217 = vsel %vm956, %v2199, 0.0
    %v2218 = vrot.slane %v2217, 4
    %v2219 = vadd.f32 %v2217, %v2218
    %v2220 = vrot.slane %v2219, 2
    %v2221 = vadd.f32 %v2219, %v2220
    %v2222 = vrot.slane %v2221, 1
    %v2223 = vadd.f32 %v2221, %v2222
    %v2227 = vrot.slane %v2053, 4
    %v2228 = vrot.slane %v2054, 4
    %v2229 = vrot.slane %v2055, 4
    %v2233 = vsel %vm940, %v2227, 0.0
    %v2234 = vrot.slane %v2233, 4
    %v2235 = vadd.f32 %v2233, %v2234
    %v2236 = vrot.slane %v2235, 2
    %v2237 = vadd.f32 %v2235, %v2236
    %v2238 = vrot.slane %v2237, 1
    %v2239 = vadd.f32 %v2237, %v2238
    %v2240 = vsel %vm948, %v2228, 0.0
    %v2241 = vrot.slane %v2240, 4
    %v2242 = vadd.f32 %v2240, %v2241
    %v2243 = vrot.slane %v2242, 2
    %v2244 = vadd.f32 %v2242, %v2243
    %v2245 = vrot.slane %v2244, 1
    %v2246 = vadd.f32 %v2244, %v2245
    %v2247 = vsel %vm956, %v2229, 0.0
    %v2248 = vrot.slane %v2247, 4
    %v2249 = vadd.f32 %v2247, %v2248
    %v2250 = vrot.slane %v2249, 2
    %v2251 = vadd.f32 %v2249, %v2250
    %v2252 = vrot.slane %v2251, 1
    %v2253 = vadd.f32 %v2251, %v2252
    %v2257 = vrot.slane %v2077, 4
    %v2258 = vrot.slane %v2078, 4
    %v2259 = vrot.slane %v2079, 4
    %v2263 = vsel %vm940, %v2257, 0.0
    %v2264 = vrot.slane %v2263, 4
    %v2265 = vadd.f32 %v2263, %v2264
    %v2266 = vrot.slane %v2265, 2
    %v2267 = vadd.f32 %v2265, %v2266
    %v2268 = vrot.slane %v2267, 1
    %v2269 = vadd.f32 %v2267, %v2268
    %v2270 = vsel %vm948, %v2258, 0.0
    %v2271 = vrot.slane %v2270, 4
    %v2272 = vadd.f32 %v2270, %v2271
    %v2273 = vrot.slane %v2272, 2
    %v2274 = vadd.f32 %v2272, %v2273
    %v2275 = vrot.slane %v2274, 1
    %v2276 = vadd.f32 %v2274, %v2275
    %v2277 = vsel %vm956, %v2259, 0.0
    %v2278 = vrot.slane %v2277, 4
    %v2279 = vadd.f32 %v2277, %v2278
    %v2280 = vrot.slane %v2279, 2
    %v2281 = vadd.f32 %v2279, %v2280
    %v2282 = vrot.slane %v2281, 1
    %v2283 = vadd.f32 %v2281, %v2282
    %v2284 = vsel %vm1147, %v2086, %v2107
    %v2285 = vsel %vm1147, %v2093, %v2114
    %v2286 = vsel %vm1147, %v2100, %v2121
    %v2287 = vsel %vm1151, %v2284, %v2128
    %v2288 = vsel %vm1151, %v2285, %v2135
    %v2289 = vsel %vm1151, %v2286, %v2142
    %v2290 = vsel %vm1155, %v2287, %v2149
    %v2291 = vsel %vm1155, %v2288, %v2156
    %v2292 = vsel %vm1155, %v2289, %v2163
    %v2293 = vsel %vm948, %v2290, %v2179
    %v2294 = vsel %vm948, %v2291, %v2186
    %v2295 = vsel %vm948, %v2292, %v2193
    %v2296 = vsel %vm1162, %v2293, %v2209
    %v2297 = vsel %vm1162, %v2294, %v2216
    %v2298 = vsel %vm1162, %v2295, %v2223
    %v2299 = vsel %vm1166, %v2296, %v2239
    %v2300 = vsel %vm1166, %v2297, %v2246
    %v2301 = vsel %vm1166, %v2298, %v2253
    %v2302 = vsel %vm1170, %v2299, %v2269
    %v2303 = vsel %vm1170, %v2300, %v2276
    %v2304 = vsel %vm1170, %v2301, %v2283
    %v2305 = vld [vmem:[%s5] sm:$0xff]
    %v2306 = vld [vmem:[%s6] sm:$0xff]
    %2310 = vrot.lane.b32.xlu0 %v2302, 17
    %v2311 = vpop.permute.xlu0 %2310
    %2312 = vrot.lane.b32.xlu0 %v2303, 17
    %v2313 = vpop.permute.xlu0 %2312
    %2314 = vrot.lane.b32.xlu0 %v2304, 17
    %v2315 = vpop.permute.xlu0 %2314
    %v2316 = vsel %vm835, %v2311, %v2313
    %v2317 = vsel %vm835, %v2313, %v2315
    %v2320 = vadd.f32 %v2316, %v2317
    %2321 = vadd.xlane.f32.xlu0 %v2320
    %v2322 = vpop.xlane.xlu0 %2321
    %v2324 = vrot.slane %v2322, 4
    %v2326 = vadd.f32 %v2322, %v2324
    %v2328 = vrot.slane %v2326, 4
    %v2330 = vsel %vm948, %v2326, %v2328
    %v2331 = vmul.f32 %v2330, 0.001953125
    %2333 = vset.pattern.permute.xlu0 0
    %2334 = vperm.xlu0 %2333, %v2331
    %v2335 = vpop.permute.xlu0 %2334
    %v2337 = vsub.f32 %v2302, %v2335
    %v2338 = vsub.f32 %v2303, %v2335
    %v2339 = vsub.f32 %v2304, %v2335
    %v2340 = vmul.f32 %v2337, %v2337
    %v2341 = vmul.f32 %v2338, %v2338
    %v2342 = vmul.f32 %v2339, %v2339
    %2346 = vrot.lane.b32.xlu0 %v2340, 17
    %v2347 = vpop.permute.xlu0 %2346
    %2348 = vrot.lane.b32.xlu0 %v2341, 17
    %v2349 = vpop.permute.xlu0 %2348
    %2350 = vrot.lane.b32.xlu0 %v2342, 17
    %v2351 = vpop.permute.xlu0 %2350
    %v2352 = vsel %vm835, %v2347, %v2349
    %v2353 = vsel %vm835, %v2349, %v2351
    %v2356 = vadd.f32 %v2352, %v2353
    %2357 = vadd.xlane.f32.xlu0 %v2356
    %v2358 = vpop.xlane.xlu0 %2357
    %v2360 = vrot.slane %v2358, 4
    %v2362 = vadd.f32 %v2358, %v2360
    %v2364 = vrot.slane %v2362, 4
    %v2366 = vsel %vm948, %v2362, %v2364
    %v2367 = vmul.f32 %v2366, 0.001953125
    %v2368 = vadd.f32 %v2367, 1e-05
    %v2369 = vrsqrt.pop %v2368
    %v2370 = vmul.f32 %v2369, %v2305
    %2372 = vset.pattern.permute.xlu0 0
    %2373 = vperm.xlu0 %2372, %v2370
    %v2374 = vpop.permute.xlu0 %2373
    %v2376 = vmul.f32 %v2337, %v2374
    %v2377 = vmul.f32 %v2338, %v2374
    %v2378 = vmul.f32 %v2339, %v2374
    %2380 = vset.pattern.permute.xlu0 0
    %2381 = vperm.xlu0 %2380, %v2306
    %v2382 = vpop.permute.xlu0 %2381
    %v2384 = vadd.f32 %v2376, %v2382
    %v2385 = vadd.f32 %v2377, %v2382
    %v2386 = vadd.f32 %v2378, %v2382
    %2389 = vrot.lane.b32.xlu0 %v27, 111
    %v2390 = vpop.permute.xlu0 %2389
    %2391 = vrot.lane.b32.xlu0 %v28, 111
    %v2392 = vpop.permute.xlu0 %2391
    %v2393 = vsel %vm75, %v2390, %v2392
    %v2397 = vadd.f32 %v2384, %v2390
    %v2398 = vadd.f32 %v2385, %v2393
    %v2399 = vadd.f32 %v2386, %v2392
    %vm2400 = vcmp.ge.f32.partialorder %v2397, 0.0
    %vm2401 = vcmp.ge.f32.partialorder %v2398, 0.0
    %vm2402 = vcmp.ge.f32.partialorder %v2399, 0.0
    %v2403 = vmul.f32 %v2397, 0.01
    %v2404 = vmul.f32 %v2398, 0.01
    %v2405 = vmul.f32 %v2399, 0.01
    %v2406 = vsel %vm2400, %v2397, %v2403
    %v2407 = vsel %vm2401, %v2398, %v2404
    %v2408 = vsel %vm2402, %v2399, %v2405
    %2412 = vrot.lane.b32.xlu0 %v2406, 17
    %v2413 = vpop.permute.xlu0 %2412
    %2414 = vrot.lane.b32.xlu0 %v2407, 17
    %v2415 = vpop.permute.xlu0 %2414
    %2416 = vrot.lane.b32.xlu0 %v2408, 17
    %v2417 = vpop.permute.xlu0 %2416
    %v2418 = vsel %vm835, %v2413, %v2415
    %v2419 = vsel %vm835, %v2415, %v2417
    %2422 = vst [vmem:[#allocation2] sm:$0xff] %v2418
    %2423 = vst [vmem:[#allocation2 + $0x8] sm:$0xff] %v2419
    // Predicated region
    $region30: #{tpu_custom_call.1} parent=1 // pred_check
      _
    $region31: #{tpu_custom_call.1} parent=1 // pred_check_branch
      %2425 = sbr.rel (0) target = $region33
    $region32: #{tpu_custom_call.1} parent=1 // pred_region
      %s2427 = ssub.s32 256, 256
      %2428 = vsyncadd [#allocation3], %s2427
      %s2430 = sshll.u32 [#allocation2], 4
      %s2431 = int_to_ptr.vmem [resolvable:$true] %s2430
      %2433 = dma.vmem_to_hbm [thread:$0]  %s2431, 256, %s7, [#allocation3]
    $region33: #{tpu_custom_call.1} parent=1 // pred_fallthru
      _
    // Predicated region
    $region34: #{tpu_custom_call.1} parent=1 // pred_check
      _
    $region35: #{tpu_custom_call.1} parent=1 // pred_check_branch
      %2435 = sbr.rel (0) target = $region37
    $region36: #{tpu_custom_call.1} parent=1 // pred_region
      %2436 = dma.done [#allocation3], 256
    $region37: #{tpu_custom_call.1} parent=1 // pred_fallthru
      _
    %2437 = vsyncpa [#allocation3], 1

</llo_original>
